<compile_context>
chip_gen: v6e
topology: v6e:2x2x1
jax: 0.10.0
libtpu: 0.0.40
codegen_flags: <defaults>
</compile_context>

<pallas_src>
import functools
import math

import jax
import jax.numpy as jnp
from jax.experimental import pallas as pl
from jax.experimental.pallas import tpu as pltpu

D_MODEL = 32
NUM_HEADS = 4
D_FF = 64
HEAD_DIM = D_MODEL // NUM_HEADS
LN_EPS = 1e-5
NEG_INF = -1e9

# ---- packed slab layout -----------------------------------------------------
# w_in  [D_MODEL, 256] (all matmuls whose input has D_MODEL features):
#   [0:96)    Wq|Wk|Wv  self-attention       (q-scale folded into Wq columns)
#   [96:128)  Wq        enc-dec attention    (q-scale folded in)
#   [128:192) Wk|Wv     enc-dec attention    (input = encoder output)
#   [192:256) W1        feed-forward
QKV1_OFF, Q2_OFF, KV2_OFF, FF1_OFF = 0, 96, 128, 192
# w_out [128, D_MODEL] (row-packed output-side weights):
#   rows [0:32) Wo self-attn, [32:64) Wo enc-dec attn, [64:128) W2 of FFN
WO1_ROW, WO2_ROW, FF2_ROW = 0, 32, 64
# param slab [7, 352]: row 0 = all biases (below), rows 1..6 = g1,b1,g2,b2,g3,b3
# (LayerNorm rows zero-padded to 352 lanes).
B_QKV1, B_Q2, B_KV2, B_FF1, B_O1, B_O2, B_FF2 = 0, 96, 128, 192, 256, 288, 320


# ----------------------------------------------------------------------------
# In-kernel helpers
# ----------------------------------------------------------------------------
def _layernorm(x, gamma, beta):
    mu = jnp.mean(x, axis=-1, keepdims=True)
    var = jnp.mean((x - mu) ** 2, axis=-1, keepdims=True)
    return (x - mu) * jax.lax.rsqrt(var + LN_EPS) * gamma + beta


def _attention(q, k, v, bias, w_out_ref, wo_row, bo, nq):
    """Stacked multi-head attention core.

    q: [nq, D_MODEL] (scale already folded into the projection weights),
    k/v: [nk, D_MODEL], bias: [H*nq, H*nk] (head, batch)-block-diagonal
    additive mask bias.  Heads are stacked along sublanes so the whole
    attention block is ONE score matmul, ONE softmax chain and ONE p@v matmul.
    The output projection is accumulated per head (sublane-aligned weight row
    slices) so no lane-axis head concat is ever materialized.
    """
    def stack(a):  # [rows, D_MODEL] -> [H*rows, HEAD_DIM], head-major along sublanes
        return jnp.concatenate(
            [a[:, h * HEAD_DIM:(h + 1) * HEAD_DIM] for h in range(NUM_HEADS)], axis=0)

    q_st, k_st, v_st = stack(q), stack(k), stack(v)
    # q_st @ k_st^T without materializing a transpose; cross-(head,batch)
    # entries get -1e9 from `bias`, so one softmax over the row is exact.
    s = jax.lax.dot_general(q_st, k_st, (((1,), (1,)), ((), ())),
                            preferred_element_type=jnp.float32) + bias
    s = s - jnp.max(s, axis=-1, keepdims=True)
    p = jnp.exp(s)
    p = p * pl.reciprocal(jnp.sum(p, axis=-1, keepdims=True), approx=True)
    o_st = jnp.dot(p, v_st, preferred_element_type=jnp.float32)      # [H*nq, HEAD_DIM]

    out = None
    for h in range(NUM_HEADS):                        # 4 sublane-sliced matmuls
        oh = o_st[h * nq:(h + 1) * nq, :]
        wo_h = w_out_ref[wo_row + h * HEAD_DIM: wo_row + (h + 1) * HEAD_DIM, :]
        c = jnp.dot(oh, wo_h, preferred_element_type=jnp.float32)
        out = c if out is None else out + c
    return out + bo


# ----------------------------------------------------------------------------
# Pallas kernel: full decoder layer for a chunk of the batch, flattened rows.
# ----------------------------------------------------------------------------
def decoder_layer_kernel(x_ref, enc_ref, bias_ref, w_in_ref, w_out_ref, p_ref,
                         out_ref, *, bc, t, s):
    n = bc * t        # decoder rows in this chunk
    ns = bc * s       # encoder rows in this chunk
    x = x_ref[...]    # [n, D]
    enc = enc_ref[...]  # [ns, D]

    def b(off, width):          # packed bias row
        return p_ref[0:1, off:off + width]

    def ln(i):                  # packed LayerNorm row (g1,b1,g2,b2,g3,b3)
        return p_ref[1 + i:2 + i, 0:D_MODEL]

    bias_self = bias_ref[:, 0:NUM_HEADS * n]                       # [H*n, H*n]
    bias_cross = bias_ref[:, NUM_HEADS * n:NUM_HEADS * (n + ns)]   # [H*n, H*ns]

    # ---- self attention (fused QKV projection; q scale folded into weights) ----
    qkv = jnp.dot(x, w_in_ref[:, QKV1_OFF:QKV1_OFF + 3 * D_MODEL],
                  preferred_element_type=jnp.float32) + b(B_QKV1, 3 * D_MODEL)
    sa = _attention(qkv[:, 0:D_MODEL],
                    qkv[:, D_MODEL:2 * D_MODEL],
                    qkv[:, 2 * D_MODEL:3 * D_MODEL],
                    bias_self, w_out_ref, WO1_ROW, b(B_O1, D_MODEL), n)
    x1 = _layernorm(x + sa, ln(0), ln(1))

    # ---- encoder-decoder attention (fused KV projection of encoder output) ----
    q2 = jnp.dot(x1, w_in_ref[:, Q2_OFF:Q2_OFF + D_MODEL],
                 preferred_element_type=jnp.float32) + b(B_Q2, D_MODEL)
    kv2 = jnp.dot(enc, w_in_ref[:, KV2_OFF:KV2_OFF + 2 * D_MODEL],
                  preferred_element_type=jnp.float32) + b(B_KV2, 2 * D_MODEL)
    eda = _attention(q2, kv2[:, 0:D_MODEL], kv2[:, D_MODEL:2 * D_MODEL],
                     bias_cross, w_out_ref, WO2_ROW, b(B_O2, D_MODEL), n)
    x2 = _layernorm(x1 + eda, ln(2), ln(3))

    # ---- feed-forward: Linear -> ReLU -> (dropout = id) -> Linear ----
    h = jnp.maximum(jnp.dot(x2, w_in_ref[:, FF1_OFF:FF1_OFF + D_FF],
                            preferred_element_type=jnp.float32) + b(B_FF1, D_FF), 0.0)
    ff = jnp.dot(h, w_out_ref[FF2_ROW:FF2_ROW + D_FF, :],
                 preferred_element_type=jnp.float32) + b(B_FF2, D_MODEL)
    out_ref[...] = _layernorm(x2 + ff, ln(4), ln(5))


# ----------------------------------------------------------------------------
# Wrapper: pack parameters into 3 slabs, precompute block-diagonal mask biases.
# ----------------------------------------------------------------------------
def pack_params(params):
    """Pack the 26 parameter arrays into 3 slabs (call once; weights are static)."""
    (wq1, bq1, wk1, bk1, wv1, bv1, wo1, bo1,
     wq2, bq2, wk2, bk2, wv2, bv2, wo2, bo2,
     g1, be1, g2, be2, g3, be3,
     wf1, bf1, wf2, bf2) = params
    scale = 1.0 / math.sqrt(HEAD_DIM)
    wq1s, bq1s = wq1 * scale, bq1 * scale        # fold score scale into q proj
    wq2s, bq2s = wq2 * scale, bq2 * scale
    w_in = jnp.concatenate([wq1s, wk1, wv1, wq2s, wk2, wv2, wf1], axis=1)   # [32, 256]
    w_out = jnp.concatenate([wo1, wo2, wf2], axis=0)                        # [128, 32]
    biases = jnp.concatenate([bq1s, bk1, bv1, bq2s, bk2, bv2, bf1, bo1, bo2, bf2],
                             axis=1)                                        # [1, 352]
    ln = jnp.concatenate([g1, be1, g2, be2, g3, be3], axis=0)               # [6, 32]
    ln_pad = jnp.pad(ln, ((0, 0), (0, biases.shape[1] - D_MODEL)))
    p_slab = jnp.concatenate([biases, ln_pad], axis=0)                      # [7, 352]
    return w_in, w_out, p_slab


def _block_diag_bias(mask, bc, t_q, t_k):
    """(head, batch)-block-diagonal additive bias for sublane-stacked attention.

    Row i of the stacked q layout is (head = i // (bc*t_q), batch, position);
    the bias equals the usual mask bias inside the matching (head, batch)
    block and -1e9 everywhere else, so one softmax over the stacked rows is
    exactly the per-(batch, head) softmax.
    """
    mb = jnp.where(mask == 0.0, jnp.float32(NEG_INF), jnp.float32(0.0))
    nblk = NUM_HEADS * bc
    rows, cols = nblk * t_q, nblk * t_k
    tiled = jnp.tile(mb, (nblk, nblk))
    rblk = jnp.arange(rows)[:, None] // t_q
    cblk = jnp.arange(cols)[None, :] // t_k
    return jnp.where(rblk == cblk, tiled, jnp.float32(NEG_INF))


def decoder_layer(x, enc, tgt_mask, src_mask, params=None, *, packed=None,
                  num_batch_chunks=1):
    """num_batch_chunks=1 (default) runs the whole batch in one grid step
    (best for tiny batches on v5e/v6e and also on v7x).  Only split across
    v7x's two TensorCores when per-chunk work is substantial (>= ~256 rows).
    Pass `packed=pack_params(params)` to avoid re-packing static weights."""
    B, T, D = x.shape
    S = enc.shape[1]
    assert D == D_MODEL and B % num_batch_chunks == 0
    bc = B // num_batch_chunks

    if packed is None:
        packed = pack_params(params)
    w_in, w_out, p_slab = packed

    # Precomputed additive mask biases (shared by all chunks), packed into one slab.
    bias_self = _block_diag_bias(tgt_mask, bc, T, T)     # [H*bc*T, H*bc*T]
    bias_cross = _block_diag_bias(src_mask, bc, T, S)    # [H*bc*T, H*bc*S]
    attn_bias = jnp.concatenate([bias_self, bias_cross], axis=1)

    x2d = x.reshape(B * T, D)
    enc2d = enc.reshape(B * S, D)

    kernel = functools.partial(decoder_layer_kernel, bc=bc, t=T, s=S)

    out2d = pl.pallas_call(
        kernel,
        out_shape=jax.ShapeDtypeStruct((B * T, D), jnp.float32),
        grid=(num_batch_chunks,),
        in_specs=[
            pl.BlockSpec((bc * T, D), lambda c: (c, 0)),        # x rows for this chunk
            pl.BlockSpec((bc * S, D), lambda c: (c, 0)),        # encoder rows for this chunk
            pl.BlockSpec(attn_bias.shape, lambda c: (0, 0)),    # packed mask biases (shared)
            pl.BlockSpec(w_in.shape, lambda c: (0, 0)),         # packed D_MODEL-input weights
            pl.BlockSpec(w_out.shape, lambda c: (0, 0)),        # packed output-side weights
            pl.BlockSpec(p_slab.shape, lambda c: (0, 0)),       # packed biases + layernorm params
        ],
        out_specs=pl.BlockSpec((bc * T, D), lambda c: (c, 0)),
        compiler_params=pltpu.CompilerParams(dimension_semantics=("parallel",)),
    )(x2d, enc2d, attn_bias, w_in, w_out, p_slab)
    return out2d.reshape(B, T, D)


# ----------------------------------------------------------------------------
# Deterministic parameter init (synthetic; mirrors the module's shapes).
# ----------------------------------------------------------------------------
def init_params(key):
    def lin(k, din, dout):
        kw, kb = jax.random.split(k)
        w = jax.random.normal(kw, (din, dout), jnp.float32) * 0.05
        b = jax.random.normal(kb, (1, dout), jnp.float32) * 0.05
        return [w, b]

    keys = jax.random.split(key, 10)
    params = []
    for i in range(4):                       # self-attn: Wq, Wk, Wv, Wo
        params += lin(keys[i], D_MODEL, D_MODEL)
    for i in range(4):                       # enc-dec attn: Wq, Wk, Wv, Wo
        params += lin(keys[4 + i], D_MODEL, D_MODEL)
    for _ in range(3):                       # norm1, norm2, norm3
        params += [jnp.ones((1, D_MODEL), jnp.float32),
                   jnp.zeros((1, D_MODEL), jnp.float32)]
    params += lin(keys[8], D_MODEL, D_FF)    # FFN layer 1
    params += lin(keys[9], D_FF, D_MODEL)    # FFN layer 2
    return params


# ----------------------------------------------------------------------------
# Pure-JAX reference (unpacked weights, exact softmax) for correctness check.
# ----------------------------------------------------------------------------
def _mha_ref(q_in, k_in, v_in, wq, bq, wk, bk, wv, bv, wo, bo, mask):
    q = q_in @ wq + bq
    k = k_in @ wk + bk
    v = v_in @ wv + bv
    scale = 1.0 / math.sqrt(HEAD_DIM)
    heads = []
    for h in range(NUM_HEADS):
        sl = slice(h * HEAD_DIM, (h + 1) * HEAD_DIM)
        s = (q[:, sl] @ k[:, sl].T) * scale
        s = jnp.where(mask == 0, NEG_INF, s)
        p = jax.nn.softmax(s, axis=-1)
        heads.append(p @ v[:, sl])
    return jnp.concatenate(heads, axis=-1) @ wo + bo


def _decoder_body_ref(x, enc, tmask, smask, params):
    (wq1, bq1, wk1, bk1, wv1, bv1, wo1, bo1,
     wq2, bq2, wk2, bk2, wv2, bv2, wo2, bo2,
     g1, be1, g2, be2, g3, be3,
     wf1, bf1, wf2, bf2) = params
    sa = _mha_ref(x, x, x, wq1, bq1, wk1, bk1, wv1, bv1, wo1, bo1, tmask)
    x = _layernorm(x + sa, g1, be1)
    eda = _mha_ref(x, enc, enc, wq2, bq2, wk2, bk2, wv2, bv2, wo2, bo2, smask)
    x = _layernorm(x + eda, g2, be2)
    h = jnp.maximum(x @ wf1 + bf1, 0.0)
    x = _layernorm(x + h @ wf2 + bf2, g3, be3)
    return x


def reference(x, enc, tmask, smask, params):
    return jax.vmap(lambda xb, eb: _decoder_body_ref(xb, eb, tmask, smask, params))(x, enc)


if __name__ == "__main__":
    B, T, S = 2, 8, 8
    key = jax.random.PRNGKey(0)
    kx, kenc, kp = jax.random.split(key, 3)

    x = jax.random.normal(kx, (B, T, D_MODEL), jnp.float32)
    enc_out = jax.random.normal(kenc, (B, S, D_MODEL), jnp.float32)
    tgt_mask = jnp.tril(jnp.ones((T, T), jnp.float32))   # causal decoder mask
    src_mask = jnp.ones((T, S), jnp.float32)             # no source masking
    params = init_params(kp)

    packed = pack_params(params)                          # pack static weights once
    out = decoder_layer(x, enc_out, tgt_mask, src_mask, packed=packed)
    out = jax.block_until_ready(out)

    ref = reference(x, enc_out, tgt_mask, src_mask, params)
    assert out.shape == (B, T, D_MODEL)
    # slightly relaxed tolerance: softmax denominator uses the EUP approximate
    # reciprocal inside the kernel (exact division in the reference).
    assert jnp.allclose(out, ref, atol=2e-3, rtol=2e-3), "Pallas kernel mismatch vs JAX reference"

    print("KERNEL_OK")
</pallas_src>

<mosaic_0001>
module attributes {stable_mosaic.version = 11 : i64} {
  func.func @decoder_layer_kernel(%arg0: i32, %arg1: memref<16x32xf32, #tpu.memory_space<vmem>>, %arg2: memref<16x32xf32, #tpu.memory_space<vmem>>, %arg3: memref<64x128xf32, #tpu.memory_space<vmem>>, %arg4: memref<32x256xf32, #tpu.memory_space<vmem>>, %arg5: memref<128x32xf32, #tpu.memory_space<vmem>>, %arg6: memref<7x352xf32, #tpu.memory_space<vmem>>, %arg7: memref<16x32xf32, #tpu.memory_space<vmem>>) attributes {dimension_semantics = [#tpu.dimension_semantics<parallel>], iteration_bounds = array<i64: 1>, scalar_prefetch = 0 : i64, scratch_operands = 0 : i64, tpu.core_type = #tpu.core_type<tc>, window_params = [{transform_indices = @transform_0, window_bounds = array<i64: 16, 32>}, {transform_indices = @transform_1, window_bounds = array<i64: 16, 32>}, {pipeline_mode = #tpu.pipeline_mode<synchronous>, transform_indices = @transform_2, window_bounds = array<i64: 64, 128>}, {pipeline_mode = #tpu.pipeline_mode<synchronous>, transform_indices = @transform_3, window_bounds = array<i64: 32, 256>}, {pipeline_mode = #tpu.pipeline_mode<synchronous>, transform_indices = @transform_4, window_bounds = array<i64: 128, 32>}, {pipeline_mode = #tpu.pipeline_mode<synchronous>, transform_indices = @transform_5, window_bounds = array<i64: 7, 352>}, {transform_indices = @transform_6, window_bounds = array<i64: 16, 32>}]} {
    %c0 = arith.constant 0 : index
    %c0_0 = arith.constant 0 : index
    %0 = vector.load %arg1[%c0, %c0_0] : memref<16x32xf32, #tpu.memory_space<vmem>>, vector<16x32xf32>
    %c0_1 = arith.constant 0 : index
    %c0_2 = arith.constant 0 : index
    %1 = vector.load %arg2[%c0_1, %c0_2] : memref<16x32xf32, #tpu.memory_space<vmem>>, vector<16x32xf32>
    %c0_3 = arith.constant 0 : index
    %c0_4 = arith.constant 0 : index
    %2 = vector.load %arg3[%c0_3, %c0_4] : memref<64x128xf32, #tpu.memory_space<vmem>>, vector<64x64xf32>
    %c0_5 = arith.constant 0 : index
    %c64 = arith.constant 64 : index
    %3 = vector.load %arg3[%c0_5, %c64] : memref<64x128xf32, #tpu.memory_space<vmem>>, vector<64x64xf32>
    %c0_6 = arith.constant 0 : index
    %c0_7 = arith.constant 0 : index
    %4 = vector.load %arg4[%c0_6, %c0_7] : memref<32x256xf32, #tpu.memory_space<vmem>>, vector<32x96xf32>
    %cst = arith.constant dense<0.000000e+00> : vector<16x96xf32>
    %5 = tpu.matmul %0, %4, %cst {dimension_numbers = #tpu.dot_dimension_numbers<[1], [0], [0], [1], [0, 0, 1, 1], [], []>} : vector<16x32xf32>, vector<32x96xf32>, vector<16x96xf32> -> vector<16x96xf32>
    %c0_8 = arith.constant 0 : index
    %c0_9 = arith.constant 0 : index
    %6 = vector.load %arg6[%c0_8, %c0_9] : memref<7x352xf32, #tpu.memory_space<vmem>>, vector<1x96xf32>
    %7 = vector.broadcast %6 : vector<1x96xf32> to vector<16x96xf32>
    %8 = arith.addf %5, %7 : vector<16x96xf32>
    %9 = vector.extract_strided_slice %8 {offsets = [0, 0], sizes = [16, 32], strides = [1, 1]} : vector<16x96xf32> to vector<16x32xf32>
    %10 = vector.extract_strided_slice %8 {offsets = [0, 32], sizes = [16, 32], strides = [1, 1]} : vector<16x96xf32> to vector<16x32xf32>
    %11 = vector.extract_strided_slice %8 {offsets = [0, 64], sizes = [16, 32], strides = [1, 1]} : vector<16x96xf32> to vector<16x32xf32>
    %c0_10 = arith.constant 0 : index
    %c256 = arith.constant 256 : index
    %12 = vector.load %arg6[%c0_10, %c256] : memref<7x352xf32, #tpu.memory_space<vmem>>, vector<1x32xf32>
    %13 = vector.extract_strided_slice %9 {offsets = [0, 0], sizes = [16, 8], strides = [1, 1]} : vector<16x32xf32> to vector<16x8xf32>
    %14 = vector.extract_strided_slice %9 {offsets = [0, 8], sizes = [16, 8], strides = [1, 1]} : vector<16x32xf32> to vector<16x8xf32>
    %15 = vector.extract_strided_slice %9 {offsets = [0, 16], sizes = [16, 8], strides = [1, 1]} : vector<16x32xf32> to vector<16x8xf32>
    %16 = vector.extract_strided_slice %9 {offsets = [0, 24], sizes = [16, 8], strides = [1, 1]} : vector<16x32xf32> to vector<16x8xf32>
    %17 = tpu.concatenate %13, %14, %15, %16 in 0 : vector<16x8xf32>, vector<16x8xf32>, vector<16x8xf32>, vector<16x8xf32> -> vector<64x8xf32>
    %18 = vector.extract_strided_slice %10 {offsets = [0, 0], sizes = [16, 8], strides = [1, 1]} : vector<16x32xf32> to vector<16x8xf32>
    %19 = vector.extract_strided_slice %10 {offsets = [0, 8], sizes = [16, 8], strides = [1, 1]} : vector<16x32xf32> to vector<16x8xf32>
    %20 = vector.extract_strided_slice %10 {offsets = [0, 16], sizes = [16, 8], strides = [1, 1]} : vector<16x32xf32> to vector<16x8xf32>
    %21 = vector.extract_strided_slice %10 {offsets = [0, 24], sizes = [16, 8], strides = [1, 1]} : vector<16x32xf32> to vector<16x8xf32>
    %22 = tpu.concatenate %18, %19, %20, %21 in 0 : vector<16x8xf32>, vector<16x8xf32>, vector<16x8xf32>, vector<16x8xf32> -> vector<64x8xf32>
    %23 = vector.extract_strided_slice %11 {offsets = [0, 0], sizes = [16, 8], strides = [1, 1]} : vector<16x32xf32> to vector<16x8xf32>
    %24 = vector.extract_strided_slice %11 {offsets = [0, 8], sizes = [16, 8], strides = [1, 1]} : vector<16x32xf32> to vector<16x8xf32>
    %25 = vector.extract_strided_slice %11 {offsets = [0, 16], sizes = [16, 8], strides = [1, 1]} : vector<16x32xf32> to vector<16x8xf32>
    %26 = vector.extract_strided_slice %11 {offsets = [0, 24], sizes = [16, 8], strides = [1, 1]} : vector<16x32xf32> to vector<16x8xf32>
    %27 = tpu.concatenate %23, %24, %25, %26 in 0 : vector<16x8xf32>, vector<16x8xf32>, vector<16x8xf32>, vector<16x8xf32> -> vector<64x8xf32>
    %cst_11 = arith.constant dense<0.000000e+00> : vector<64x64xf32>
    %28 = tpu.matmul %17, %22, %cst_11 {dimension_numbers = #tpu.dot_dimension_numbers<[1], [1], [0], [0], [0, 0, 1, 0], [], []>} : vector<64x8xf32>, vector<64x8xf32>, vector<64x64xf32> -> vector<64x64xf32>
    %29 = arith.addf %28, %2 : vector<64x64xf32>
    %cst_12 = arith.constant dense<0xFF800000> : vector<64xf32>
    %30 = vector.multi_reduction <maximumf>, %29, %cst_12 [1] : vector<64x64xf32> to vector<64xf32>
    %31 = vector.shape_cast %30 : vector<64xf32> to vector<64x1xf32>
    %32 = vector.broadcast %31 : vector<64x1xf32> to vector<64x64xf32>
    %33 = arith.subf %29, %32 : vector<64x64xf32>
    %34 = math.exp %33 : vector<64x64xf32>
    %cst_13 = arith.constant dense<0.000000e+00> : vector<64xf32>
    %35 = vector.multi_reduction <add>, %34, %cst_13 [1] : vector<64x64xf32> to vector<64xf32>
    %36 = vector.shape_cast %35 : vector<64xf32> to vector<64x1xf32>
    %37 = tpu.reciprocal %36 {approx = true} : vector<64x1xf32> -> vector<64x1xf32>
    %38 = vector.broadcast %37 : vector<64x1xf32> to vector<64x64xf32>
    %39 = arith.mulf %34, %38 : vector<64x64xf32>
    %cst_14 = arith.constant dense<0.000000e+00> : vector<64x8xf32>
    %40 = tpu.matmul %39, %27, %cst_14 {dimension_numbers = #tpu.dot_dimension_numbers<[1], [0], [0], [1], [0, 0, 1, 1], [], []>} : vector<64x64xf32>, vector<64x8xf32>, vector<64x8xf32> -> vector<64x8xf32>
    %41 = vector.extract_strided_slice %40 {offsets = [0, 0], sizes = [16, 8], strides = [1, 1]} : vector<64x8xf32> to vector<16x8xf32>
    %c0_15 = arith.constant 0 : index
    %c0_16 = arith.constant 0 : index
    %42 = vector.load %arg5[%c0_15, %c0_16] : memref<128x32xf32, #tpu.memory_space<vmem>>, vector<8x32xf32>
    %cst_17 = arith.constant dense<0.000000e+00> : vector<16x32xf32>
    %43 = tpu.matmul %41, %42, %cst_17 {dimension_numbers = #tpu.dot_dimension_numbers<[1], [0], [0], [1], [0, 0, 1, 1], [], []>} : vector<16x8xf32>, vector<8x32xf32>, vector<16x32xf32> -> vector<16x32xf32>
    %44 = vector.extract_strided_slice %40 {offsets = [16, 0], sizes = [16, 8], strides = [1, 1]} : vector<64x8xf32> to vector<16x8xf32>
    %c8 = arith.constant 8 : index
    %c0_18 = arith.constant 0 : index
    %45 = vector.load %arg5[%c8, %c0_18] : memref<128x32xf32, #tpu.memory_space<vmem>>, vector<8x32xf32>
    %cst_19 = arith.constant dense<0.000000e+00> : vector<16x32xf32>
    %46 = tpu.matmul %44, %45, %cst_19 {dimension_numbers = #tpu.dot_dimension_numbers<[1], [0], [0], [1], [0, 0, 1, 1], [], []>} : vector<16x8xf32>, vector<8x32xf32>, vector<16x32xf32> -> vector<16x32xf32>
    %47 = arith.addf %43, %46 : vector<16x32xf32>
    %48 = vector.extract_strided_slice %40 {offsets = [32, 0], sizes = [16, 8], strides = [1, 1]} : vector<64x8xf32> to vector<16x8xf32>
    %c16 = arith.constant 16 : index
    %c0_20 = arith.constant 0 : index
    %49 = vector.load %arg5[%c16, %c0_20] : memref<128x32xf32, #tpu.memory_space<vmem>>, vector<8x32xf32>
    %cst_21 = arith.constant dense<0.000000e+00> : vector<16x32xf32>
    %50 = tpu.matmul %48, %49, %cst_21 {dimension_numbers = #tpu.dot_dimension_numbers<[1], [0], [0], [1], [0, 0, 1, 1], [], []>} : vector<16x8xf32>, vector<8x32xf32>, vector<16x32xf32> -> vector<16x32xf32>
    %51 = arith.addf %47, %50 : vector<16x32xf32>
    %52 = vector.extract_strided_slice %40 {offsets = [48, 0], sizes = [16, 8], strides = [1, 1]} : vector<64x8xf32> to vector<16x8xf32>
    %c24 = arith.constant 24 : index
    %c0_22 = arith.constant 0 : index
    %53 = vector.load %arg5[%c24, %c0_22] : memref<128x32xf32, #tpu.memory_space<vmem>>, vector<8x32xf32>
    %cst_23 = arith.constant dense<0.000000e+00> : vector<16x32xf32>
    %54 = tpu.matmul %52, %53, %cst_23 {dimension_numbers = #tpu.dot_dimension_numbers<[1], [0], [0], [1], [0, 0, 1, 1], [], []>} : vector<16x8xf32>, vector<8x32xf32>, vector<16x32xf32> -> vector<16x32xf32>
    %55 = arith.addf %51, %54 : vector<16x32xf32>
    %56 = vector.broadcast %12 : vector<1x32xf32> to vector<16x32xf32>
    %57 = arith.addf %55, %56 : vector<16x32xf32>
    %58 = arith.addf %0, %57 : vector<16x32xf32>
    %c1 = arith.constant 1 : index
    %c0_24 = arith.constant 0 : index
    %59 = vector.load %arg6[%c1, %c0_24] : memref<7x352xf32, #tpu.memory_space<vmem>>, vector<1x32xf32>
    %c2 = arith.constant 2 : index
    %c0_25 = arith.constant 0 : index
    %60 = vector.load %arg6[%c2, %c0_25] : memref<7x352xf32, #tpu.memory_space<vmem>>, vector<1x32xf32>
    %cst_26 = arith.constant dense<0.000000e+00> : vector<16xf32>
    %61 = vector.multi_reduction <add>, %58, %cst_26 [1] : vector<16x32xf32> to vector<16xf32>
    %62 = vector.shape_cast %61 : vector<16xf32> to vector<16x1xf32>
    %cst_27 = arith.constant 3.200000e+01 : f32
    %63 = vector.broadcast %cst_27 : f32 to vector<16x1xf32>
    %64 = arith.divf %62, %63 : vector<16x1xf32>
    %65 = vector.broadcast %64 : vector<16x1xf32> to vector<16x32xf32>
    %66 = arith.subf %58, %65 : vector<16x32xf32>
    %67 = arith.mulf %66, %66 : vector<16x32xf32>
    %cst_28 = arith.constant dense<0.000000e+00> : vector<16xf32>
    %68 = vector.multi_reduction <add>, %67, %cst_28 [1] : vector<16x32xf32> to vector<16xf32>
    %69 = vector.shape_cast %68 : vector<16xf32> to vector<16x1xf32>
    %cst_29 = arith.constant 3.200000e+01 : f32
    %70 = vector.broadcast %cst_29 : f32 to vector<16x1xf32>
    %71 = arith.divf %69, %70 : vector<16x1xf32>
    %72 = vector.broadcast %64 : vector<16x1xf32> to vector<16x32xf32>
    %73 = arith.subf %58, %72 : vector<16x32xf32>
    %cst_30 = arith.constant 9.99999974E-6 : f32
    %74 = vector.broadcast %cst_30 : f32 to vector<16x1xf32>
    %75 = arith.addf %71, %74 : vector<16x1xf32>
    %76 = math.rsqrt %75 : vector<16x1xf32>
    %77 = vector.broadcast %76 : vector<16x1xf32> to vector<16x32xf32>
    %78 = arith.mulf %73, %77 : vector<16x32xf32>
    %79 = vector.broadcast %59 : vector<1x32xf32> to vector<16x32xf32>
    %80 = arith.mulf %78, %79 : vector<16x32xf32>
    %81 = vector.broadcast %60 : vector<1x32xf32> to vector<16x32xf32>
    %82 = arith.addf %80, %81 : vector<16x32xf32>
    %c0_31 = arith.constant 0 : index
    %c96 = arith.constant 96 : index
    %83 = vector.load %arg4[%c0_31, %c96] : memref<32x256xf32, #tpu.memory_space<vmem>>, vector<32x32xf32>
    %cst_32 = arith.constant dense<0.000000e+00> : vector<16x32xf32>
    %84 = tpu.matmul %82, %83, %cst_32 {dimension_numbers = #tpu.dot_dimension_numbers<[1], [0], [0], [1], [0, 0, 1, 1], [], []>} : vector<16x32xf32>, vector<32x32xf32>, vector<16x32xf32> -> vector<16x32xf32>
    %c0_33 = arith.constant 0 : index
    %c96_34 = arith.constant 96 : index
    %85 = vector.load %arg6[%c0_33, %c96_34] : memref<7x352xf32, #tpu.memory_space<vmem>>, vector<1x32xf32>
    %86 = vector.broadcast %85 : vector<1x32xf32> to vector<16x32xf32>
    %87 = arith.addf %84, %86 : vector<16x32xf32>
    %c0_35 = arith.constant 0 : index
    %c128 = arith.constant 128 : index
    %88 = vector.load %arg4[%c0_35, %c128] : memref<32x256xf32, #tpu.memory_space<vmem>>, vector<32x64xf32>
    %cst_36 = arith.constant dense<0.000000e+00> : vector<16x64xf32>
    %89 = tpu.matmul %1, %88, %cst_36 {dimension_numbers = #tpu.dot_dimension_numbers<[1], [0], [0], [1], [0, 0, 1, 1], [], []>} : vector<16x32xf32>, vector<32x64xf32>, vector<16x64xf32> -> vector<16x64xf32>
    %c0_37 = arith.constant 0 : index
    %c128_38 = arith.constant 128 : index
    %90 = vector.load %arg6[%c0_37, %c128_38] : memref<7x352xf32, #tpu.memory_space<vmem>>, vector<1x64xf32>
    %91 = vector.broadcast %90 : vector<1x64xf32> to vector<16x64xf32>
    %92 = arith.addf %89, %91 : vector<16x64xf32>
    %93 = vector.extract_strided_slice %92 {offsets = [0, 0], sizes = [16, 32], strides = [1, 1]} : vector<16x64xf32> to vector<16x32xf32>
    %94 = vector.extract_strided_slice %92 {offsets = [0, 32], sizes = [16, 32], strides = [1, 1]} : vector<16x64xf32> to vector<16x32xf32>
    %c0_39 = arith.constant 0 : index
    %c288 = arith.constant 288 : index
    %95 = vector.load %arg6[%c0_39, %c288] : memref<7x352xf32, #tpu.memory_space<vmem>>, vector<1x32xf32>
    %96 = vector.extract_strided_slice %87 {offsets = [0, 0], sizes = [16, 8], strides = [1, 1]} : vector<16x32xf32> to vector<16x8xf32>
    %97 = vector.extract_strided_slice %87 {offsets = [0, 8], sizes = [16, 8], strides = [1, 1]} : vector<16x32xf32> to vector<16x8xf32>
    %98 = vector.extract_strided_slice %87 {offsets = [0, 16], sizes = [16, 8], strides = [1, 1]} : vector<16x32xf32> to vector<16x8xf32>
    %99 = vector.extract_strided_slice %87 {offsets = [0, 24], sizes = [16, 8], strides = [1, 1]} : vector<16x32xf32> to vector<16x8xf32>
    %100 = tpu.concatenate %96, %97, %98, %99 in 0 : vector<16x8xf32>, vector<16x8xf32>, vector<16x8xf32>, vector<16x8xf32> -> vector<64x8xf32>
    %101 = vector.extract_strided_slice %93 {offsets = [0, 0], sizes = [16, 8], strides = [1, 1]} : vector<16x32xf32> to vector<16x8xf32>
    %102 = vector.extract_strided_slice %93 {offsets = [0, 8], sizes = [16, 8], strides = [1, 1]} : vector<16x32xf32> to vector<16x8xf32>
    %103 = vector.extract_strided_slice %93 {offsets = [0, 16], sizes = [16, 8], strides = [1, 1]} : vector<16x32xf32> to vector<16x8xf32>
    %104 = vector.extract_strided_slice %93 {offsets = [0, 24], sizes = [16, 8], strides = [1, 1]} : vector<16x32xf32> to vector<16x8xf32>
    %105 = tpu.concatenate %101, %102, %103, %104 in 0 : vector<16x8xf32>, vector<16x8xf32>, vector<16x8xf32>, vector<16x8xf32> -> vector<64x8xf32>
    %106 = vector.extract_strided_slice %94 {offsets = [0, 0], sizes = [16, 8], strides = [1, 1]} : vector<16x32xf32> to vector<16x8xf32>
    %107 = vector.extract_strided_slice %94 {offsets = [0, 8], sizes = [16, 8], strides = [1, 1]} : vector<16x32xf32> to vector<16x8xf32>
    %108 = vector.extract_strided_slice %94 {offsets = [0, 16], sizes = [16, 8], strides = [1, 1]} : vector<16x32xf32> to vector<16x8xf32>
    %109 = vector.extract_strided_slice %94 {offsets = [0, 24], sizes = [16, 8], strides = [1, 1]} : vector<16x32xf32> to vector<16x8xf32>
    %110 = tpu.concatenate %106, %107, %108, %109 in 0 : vector<16x8xf32>, vector<16x8xf32>, vector<16x8xf32>, vector<16x8xf32> -> vector<64x8xf32>
    %cst_40 = arith.constant dense<0.000000e+00> : vector<64x64xf32>
    %111 = tpu.matmul %100, %105, %cst_40 {dimension_numbers = #tpu.dot_dimension_numbers<[1], [1], [0], [0], [0, 0, 1, 0], [], []>} : vector<64x8xf32>, vector<64x8xf32>, vector<64x64xf32> -> vector<64x64xf32>
    %112 = arith.addf %111, %3 : vector<64x64xf32>
    %cst_41 = arith.constant dense<0xFF800000> : vector<64xf32>
    %113 = vector.multi_reduction <maximumf>, %112, %cst_41 [1] : vector<64x64xf32> to vector<64xf32>
    %114 = vector.shape_cast %113 : vector<64xf32> to vector<64x1xf32>
    %115 = vector.broadcast %114 : vector<64x1xf32> to vector<64x64xf32>
    %116 = arith.subf %112, %115 : vector<64x64xf32>
    %117 = math.exp %116 : vector<64x64xf32>
    %cst_42 = arith.constant dense<0.000000e+00> : vector<64xf32>
    %118 = vector.multi_reduction <add>, %117, %cst_42 [1] : vector<64x64xf32> to vector<64xf32>
    %119 = vector.shape_cast %118 : vector<64xf32> to vector<64x1xf32>
    %120 = tpu.reciprocal %119 {approx = true} : vector<64x1xf32> -> vector<64x1xf32>
    %121 = vector.broadcast %120 : vector<64x1xf32> to vector<64x64xf32>
    %122 = arith.mulf %117, %121 : vector<64x64xf32>
    %cst_43 = arith.constant dense<0.000000e+00> : vector<64x8xf32>
    %123 = tpu.matmul %122, %110, %cst_43 {dimension_numbers = #tpu.dot_dimension_numbers<[1], [0], [0], [1], [0, 0, 1, 1], [], []>} : vector<64x64xf32>, vector<64x8xf32>, vector<64x8xf32> -> vector<64x8xf32>
    %124 = vector.extract_strided_slice %123 {offsets = [0, 0], sizes = [16, 8], strides = [1, 1]} : vector<64x8xf32> to vector<16x8xf32>
    %c32 = arith.constant 32 : index
    %c0_44 = arith.constant 0 : index
    %125 = vector.load %arg5[%c32, %c0_44] : memref<128x32xf32, #tpu.memory_space<vmem>>, vector<8x32xf32>
    %cst_45 = arith.constant dense<0.000000e+00> : vector<16x32xf32>
    %126 = tpu.matmul %124, %125, %cst_45 {dimension_numbers = #tpu.dot_dimension_numbers<[1], [0], [0], [1], [0, 0, 1, 1], [], []>} : vector<16x8xf32>, vector<8x32xf32>, vector<16x32xf32> -> vector<16x32xf32>
    %127 = vector.extract_strided_slice %123 {offsets = [16, 0], sizes = [16, 8], strides = [1, 1]} : vector<64x8xf32> to vector<16x8xf32>
    %c40 = arith.constant 40 : index
    %c0_46 = arith.constant 0 : index
    %128 = vector.load %arg5[%c40, %c0_46] : memref<128x32xf32, #tpu.memory_space<vmem>>, vector<8x32xf32>
    %cst_47 = arith.constant dense<0.000000e+00> : vector<16x32xf32>
    %129 = tpu.matmul %127, %128, %cst_47 {dimension_numbers = #tpu.dot_dimension_numbers<[1], [0], [0], [1], [0, 0, 1, 1], [], []>} : vector<16x8xf32>, vector<8x32xf32>, vector<16x32xf32> -> vector<16x32xf32>
    %130 = arith.addf %126, %129 : vector<16x32xf32>
    %131 = vector.extract_strided_slice %123 {offsets = [32, 0], sizes = [16, 8], strides = [1, 1]} : vector<64x8xf32> to vector<16x8xf32>
    %c48 = arith.constant 48 : index
    %c0_48 = arith.constant 0 : index
    %132 = vector.load %arg5[%c48, %c0_48] : memref<128x32xf32, #tpu.memory_space<vmem>>, vector<8x32xf32>
    %cst_49 = arith.constant dense<0.000000e+00> : vector<16x32xf32>
    %133 = tpu.matmul %131, %132, %cst_49 {dimension_numbers = #tpu.dot_dimension_numbers<[1], [0], [0], [1], [0, 0, 1, 1], [], []>} : vector<16x8xf32>, vector<8x32xf32>, vector<16x32xf32> -> vector<16x32xf32>
    %134 = arith.addf %130, %133 : vector<16x32xf32>
    %135 = vector.extract_strided_slice %123 {offsets = [48, 0], sizes = [16, 8], strides = [1, 1]} : vector<64x8xf32> to vector<16x8xf32>
    %c56 = arith.constant 56 : index
    %c0_50 = arith.constant 0 : index
    %136 = vector.load %arg5[%c56, %c0_50] : memref<128x32xf32, #tpu.memory_space<vmem>>, vector<8x32xf32>
    %cst_51 = arith.constant dense<0.000000e+00> : vector<16x32xf32>
    %137 = tpu.matmul %135, %136, %cst_51 {dimension_numbers = #tpu.dot_dimension_numbers<[1], [0], [0], [1], [0, 0, 1, 1], [], []>} : vector<16x8xf32>, vector<8x32xf32>, vector<16x32xf32> -> vector<16x32xf32>
    %138 = arith.addf %134, %137 : vector<16x32xf32>
    %139 = vector.broadcast %95 : vector<1x32xf32> to vector<16x32xf32>
    %140 = arith.addf %138, %139 : vector<16x32xf32>
    %141 = arith.addf %82, %140 : vector<16x32xf32>
    %c3 = arith.constant 3 : index
    %c0_52 = arith.constant 0 : index
    %142 = vector.load %arg6[%c3, %c0_52] : memref<7x352xf32, #tpu.memory_space<vmem>>, vector<1x32xf32>
    %c4 = arith.constant 4 : index
    %c0_53 = arith.constant 0 : index
    %143 = vector.load %arg6[%c4, %c0_53] : memref<7x352xf32, #tpu.memory_space<vmem>>, vector<1x32xf32>
    %cst_54 = arith.constant dense<0.000000e+00> : vector<16xf32>
    %144 = vector.multi_reduction <add>, %141, %cst_54 [1] : vector<16x32xf32> to vector<16xf32>
    %145 = vector.shape_cast %144 : vector<16xf32> to vector<16x1xf32>
    %cst_55 = arith.constant 3.200000e+01 : f32
    %146 = vector.broadcast %cst_55 : f32 to vector<16x1xf32>
    %147 = arith.divf %145, %146 : vector<16x1xf32>
    %148 = vector.broadcast %147 : vector<16x1xf32> to vector<16x32xf32>
    %149 = arith.subf %141, %148 : vector<16x32xf32>
    %150 = arith.mulf %149, %149 : vector<16x32xf32>
    %cst_56 = arith.constant dense<0.000000e+00> : vector<16xf32>
    %151 = vector.multi_reduction <add>, %150, %cst_56 [1] : vector<16x32xf32> to vector<16xf32>
    %152 = vector.shape_cast %151 : vector<16xf32> to vector<16x1xf32>
    %cst_57 = arith.constant 3.200000e+01 : f32
    %153 = vector.broadcast %cst_57 : f32 to vector<16x1xf32>
    %154 = arith.divf %152, %153 : vector<16x1xf32>
    %155 = vector.broadcast %147 : vector<16x1xf32> to vector<16x32xf32>
    %156 = arith.subf %141, %155 : vector<16x32xf32>
    %cst_58 = arith.constant 9.99999974E-6 : f32
    %157 = vector.broadcast %cst_58 : f32 to vector<16x1xf32>
    %158 = arith.addf %154, %157 : vector<16x1xf32>
    %159 = math.rsqrt %158 : vector<16x1xf32>
    %160 = vector.broadcast %159 : vector<16x1xf32> to vector<16x32xf32>
    %161 = arith.mulf %156, %160 : vector<16x32xf32>
    %162 = vector.broadcast %142 : vector<1x32xf32> to vector<16x32xf32>
    %163 = arith.mulf %161, %162 : vector<16x32xf32>
    %164 = vector.broadcast %143 : vector<1x32xf32> to vector<16x32xf32>
    %165 = arith.addf %163, %164 : vector<16x32xf32>
    %c0_59 = arith.constant 0 : index
    %c192 = arith.constant 192 : index
    %166 = vector.load %arg4[%c0_59, %c192] : memref<32x256xf32, #tpu.memory_space<vmem>>, vector<32x64xf32>
    %cst_60 = arith.constant dense<0.000000e+00> : vector<16x64xf32>
    %167 = tpu.matmul %165, %166, %cst_60 {dimension_numbers = #tpu.dot_dimension_numbers<[1], [0], [0], [1], [0, 0, 1, 1], [], []>} : vector<16x32xf32>, vector<32x64xf32>, vector<16x64xf32> -> vector<16x64xf32>
    %c0_61 = arith.constant 0 : index
    %c192_62 = arith.constant 192 : index
    %168 = vector.load %arg6[%c0_61, %c192_62] : memref<7x352xf32, #tpu.memory_space<vmem>>, vector<1x64xf32>
    %169 = vector.broadcast %168 : vector<1x64xf32> to vector<16x64xf32>
    %170 = arith.addf %167, %169 : vector<16x64xf32>
    %cst_63 = arith.constant 0.000000e+00 : f32
    %171 = vector.broadcast %cst_63 : f32 to vector<16x64xf32>
    %172 = arith.maximumf %170, %171 : vector<16x64xf32>
    %c64_64 = arith.constant 64 : index
    %c0_65 = arith.constant 0 : index
    %173 = vector.load %arg5[%c64_64, %c0_65] : memref<128x32xf32, #tpu.memory_space<vmem>>, vector<64x32xf32>
    %cst_66 = arith.constant dense<0.000000e+00> : vector<16x32xf32>
    %174 = tpu.matmul %172, %173, %cst_66 {dimension_numbers = #tpu.dot_dimension_numbers<[1], [0], [0], [1], [0, 0, 1, 1], [], []>} : vector<16x64xf32>, vector<64x32xf32>, vector<16x32xf32> -> vector<16x32xf32>
    %c0_67 = arith.constant 0 : index
    %c320 = arith.constant 320 : index
    %175 = vector.load %arg6[%c0_67, %c320] : memref<7x352xf32, #tpu.memory_space<vmem>>, vector<1x32xf32>
    %176 = vector.broadcast %175 : vector<1x32xf32> to vector<16x32xf32>
    %177 = arith.addf %174, %176 : vector<16x32xf32>
    %178 = arith.addf %165, %177 : vector<16x32xf32>
    %c5 = arith.constant 5 : index
    %c0_68 = arith.constant 0 : index
    %179 = vector.load %arg6[%c5, %c0_68] : memref<7x352xf32, #tpu.memory_space<vmem>>, vector<1x32xf32>
    %c6 = arith.constant 6 : index
    %c0_69 = arith.constant 0 : index
    %180 = vector.load %arg6[%c6, %c0_69] : memref<7x352xf32, #tpu.memory_space<vmem>>, vector<1x32xf32>
    %cst_70 = arith.constant dense<0.000000e+00> : vector<16xf32>
    %181 = vector.multi_reduction <add>, %178, %cst_70 [1] : vector<16x32xf32> to vector<16xf32>
    %182 = vector.shape_cast %181 : vector<16xf32> to vector<16x1xf32>
    %cst_71 = arith.constant 3.200000e+01 : f32
    %183 = vector.broadcast %cst_71 : f32 to vector<16x1xf32>
    %184 = arith.divf %182, %183 : vector<16x1xf32>
    %185 = vector.broadcast %184 : vector<16x1xf32> to vector<16x32xf32>
    %186 = arith.subf %178, %185 : vector<16x32xf32>
    %187 = arith.mulf %186, %186 : vector<16x32xf32>
    %cst_72 = arith.constant dense<0.000000e+00> : vector<16xf32>
    %188 = vector.multi_reduction <add>, %187, %cst_72 [1] : vector<16x32xf32> to vector<16xf32>
    %189 = vector.shape_cast %188 : vector<16xf32> to vector<16x1xf32>
    %cst_73 = arith.constant 3.200000e+01 : f32
    %190 = vector.broadcast %cst_73 : f32 to vector<16x1xf32>
    %191 = arith.divf %189, %190 : vector<16x1xf32>
    %192 = vector.broadcast %184 : vector<16x1xf32> to vector<16x32xf32>
    %193 = arith.subf %178, %192 : vector<16x32xf32>
    %cst_74 = arith.constant 9.99999974E-6 : f32
    %194 = vector.broadcast %cst_74 : f32 to vector<16x1xf32>
    %195 = arith.addf %191, %194 : vector<16x1xf32>
    %196 = math.rsqrt %195 : vector<16x1xf32>
    %197 = vector.broadcast %196 : vector<16x1xf32> to vector<16x32xf32>
    %198 = arith.mulf %193, %197 : vector<16x32xf32>
    %199 = vector.broadcast %179 : vector<1x32xf32> to vector<16x32xf32>
    %200 = arith.mulf %198, %199 : vector<16x32xf32>
    %201 = vector.broadcast %180 : vector<1x32xf32> to vector<16x32xf32>
    %202 = arith.addf %200, %201 : vector<16x32xf32>
    %c0_75 = arith.constant 0 : index
    %c0_76 = arith.constant 0 : index
    %203 = vector.load %arg7[%c0_75, %c0_76] : memref<16x32xf32, #tpu.memory_space<vmem>>, vector<16x32xf32>
    tpu.vector_store %arg7[%c0_75, %c0_76], %202 {strides = array<i32>} : memref<16x32xf32, #tpu.memory_space<vmem>>, vector<16x32xf32>,
    return
  }
  func.func @transform_0(%arg0: i32) -> (i32, i32) {
    %c0_i32 = arith.constant 0 : i32
    %c0_i32_0 = arith.constant 0 : i32
    return %arg0, %c0_i32 : i32, i32
  }
  func.func @transform_1(%arg0: i32) -> (i32, i32) {
    %c0_i32 = arith.constant 0 : i32
    %c0_i32_0 = arith.constant 0 : i32
    return %arg0, %c0_i32 : i32, i32
  }
  func.func @transform_2(%arg0: i32) -> (i32, i32) {
    %c0_i32 = arith.constant 0 : i32
    %c0_i32_0 = arith.constant 0 : i32
    %c0_i32_1 = arith.constant 0 : i32
    return %c0_i32, %c0_i32_0 : i32, i32
  }
  func.func @transform_3(%arg0: i32) -> (i32, i32) {
    %c0_i32 = arith.constant 0 : i32
    %c0_i32_0 = arith.constant 0 : i32
    %c0_i32_1 = arith.constant 0 : i32
    return %c0_i32, %c0_i32_0 : i32, i32
  }
  func.func @transform_4(%arg0: i32) -> (i32, i32) {
    %c0_i32 = arith.constant 0 : i32
    %c0_i32_0 = arith.constant 0 : i32
    %c0_i32_1 = arith.constant 0 : i32
    return %c0_i32, %c0_i32_0 : i32, i32
  }
  func.func @transform_5(%arg0: i32) -> (i32, i32) {
    %c0_i32 = arith.constant 0 : i32
    %c0_i32_0 = arith.constant 0 : i32
    %c0_i32_1 = arith.constant 0 : i32
    return %c0_i32, %c0_i32_0 : i32, i32
  }
  func.func @transform_6(%arg0: i32) -> (i32, i32) {
    %c0_i32 = arith.constant 0 : i32
    %c0_i32_0 = arith.constant 0 : i32
    return %arg0, %c0_i32 : i32, i32
  }
}

</mosaic_0001>

<llo_original>
// kernel: tpu_custom_call.1
$region0: #{tpu_custom_call.1}
  #allocation0 [shape = 'u32[]', space=smem, size = 0x4, offset = 0x4, fixed_abs, tag = 'smem constant byte address 0x4 - core index']
  #allocation1 [shape = 'u32[144,128]{1,0:T(1,128)}', space=vmem, size = 0x12000, scoped, tag = 'internal scratch']
  %s0 = inlined_call_operand.hbm [shape: f32[16,32], index: 0, kind: input, shape index: {}]
  %s1 = inlined_call_operand.hbm [shape: f32[16,32], index: 1, kind: input, shape index: {}]
  %s2 = inlined_call_operand.vmem [shape: f32[64,128], index: 2, kind: input, shape index: {}]
  %s3 = inlined_call_operand.vmem [shape: f32[32,256], index: 3, kind: input, shape index: {}]
  %s4 = inlined_call_operand.vmem [shape: f32[128,32], index: 4, kind: input, shape index: {}]
  %s5 = inlined_call_operand.vmem [shape: f32[7,352], index: 5, kind: input, shape index: {}]
  %s6 = inlined_call_operand.hbm [shape: f32[16,32], index: 6, kind: output, shape index: {}]
  %s7 = sld [smem:[#allocation0]]
  $region42: #{tpu_custom_call.1} parent=0
    _
  %s9 = ssub.s32 1, %s7
  %s10 = scalar_select 0, %s9, %s7
  $region1: #{tpu_custom_call.1} parent=0
    #allocation2 [shape = 'u8[8192]{0}', space=vmem, size = 0x2000, scoped, tag = 'input window, operand 0, single buffered']
    #allocation3 [shape = 's32[1]{0}', space=sflag, size = 0x4, scoped, tag = 'scoped memory for tpu_custom_call.1']
    #allocation4 [shape = 's32[1]{0}', space=sflag, size = 0x4, scoped, tag = 'scoped memory for tpu_custom_call.1']
    #allocation5 [shape = 'u8[8192]{0}', space=vmem, size = 0x2000, scoped, tag = 'input window, operand 1, single buffered']
    #allocation6 [shape = 's32[1]{0}', space=sflag, size = 0x4, scoped, tag = 'scoped memory for tpu_custom_call.1']
    #allocation7 [shape = 'u8[8192]{0}', space=vmem, size = 0x2000, scoped, tag = 'output window, operand 0, single buffered']
    %11 = vsyncpa [#allocation3], 0
    %12 = vsyncpa [#allocation6], 0
    %13 = vsyncpa [#allocation4], 0
    // Predicated region
    $region2: #{tpu_custom_call.1} parent=1 // pred_check
      _
    $region3: #{tpu_custom_call.1} parent=1 // pred_check_branch
      %15 = sbr.rel (0) target = $region5
    $region4: #{tpu_custom_call.1} parent=1 // pred_region
      %s17 = ssub.s32 256, 256
      %18 = vsyncadd [#allocation3], %s17
      %s19 = sshll.u32 [#allocation2], 4
      %s20 = int_to_ptr.vmem [resolvable:$true] %s19
      %25 = dma.hbm_to_vmem [thread:$0]  %s0, 256, %s20, [#allocation3], 128, 128, 8
    $region5: #{tpu_custom_call.1} parent=1 // pred_fallthru
      _
    // Predicated region
    $region6: #{tpu_custom_call.1} parent=1 // pred_check
      _
    $region7: #{tpu_custom_call.1} parent=1 // pred_check_branch
      %27 = sbr.rel (0) target = $region9
    $region8: #{tpu_custom_call.1} parent=1 // pred_region
      %s29 = ssub.s32 256, 256
      %30 = vsyncadd [#allocation6], %s29
      %s31 = sshll.u32 [#allocation5], 4
      %s32 = int_to_ptr.vmem [resolvable:$true] %s31
      %37 = dma.hbm_to_vmem [thread:$0]  %s1, 256, %s32, [#allocation6], 128, 128, 8
    $region9: #{tpu_custom_call.1} parent=1 // pred_fallthru
      _
    // Predicated region
    $region10: #{tpu_custom_call.1} parent=1 // pred_check
      _
    $region11: #{tpu_custom_call.1} parent=1 // pred_check_branch
      %39 = sbr.rel (0) target = $region13
    $region12: #{tpu_custom_call.1} parent=1 // pred_region
      _
    $region13: #{tpu_custom_call.1} parent=1 // pred_fallthru
      _
    // Predicated region
    $region14: #{tpu_custom_call.1} parent=1 // pred_check
      _
    $region15: #{tpu_custom_call.1} parent=1 // pred_check_branch
      %41 = sbr.rel (0) target = $region17
    $region16: #{tpu_custom_call.1} parent=1 // pred_region
      _
    $region17: #{tpu_custom_call.1} parent=1 // pred_fallthru
      _
    // Predicated region
    $region18: #{tpu_custom_call.1} parent=1 // pred_check
      _
    $region19: #{tpu_custom_call.1} parent=1 // pred_check_branch
      %43 = sbr.rel (0) target = $region21
    $region20: #{tpu_custom_call.1} parent=1 // pred_region
      _
    $region21: #{tpu_custom_call.1} parent=1 // pred_fallthru
      _
    // Predicated region
    $region22: #{tpu_custom_call.1} parent=1 // pred_check
      _
    $region23: #{tpu_custom_call.1} parent=1 // pred_check_branch
      %45 = sbr.rel (0) target = $region25
    $region24: #{tpu_custom_call.1} parent=1 // pred_region
      _
    $region25: #{tpu_custom_call.1} parent=1 // pred_fallthru
      _
    // Predicated region
    $region26: #{tpu_custom_call.1} parent=1 // pred_check
      _
    $region27: #{tpu_custom_call.1} parent=1 // pred_check_branch
      %47 = sbr.rel (0) target = $region29
    $region28: #{tpu_custom_call.1} parent=1 // pred_region
      %48 = dma.done [#allocation3], 256
    $region29: #{tpu_custom_call.1} parent=1 // pred_fallthru
      _
    // Predicated region
    $region30: #{tpu_custom_call.1} parent=1 // pred_check
      _
    $region31: #{tpu_custom_call.1} parent=1 // pred_check_branch
      %50 = sbr.rel (0) target = $region33
    $region32: #{tpu_custom_call.1} parent=1 // pred_region
      %51 = dma.done [#allocation6], 256
    $region33: #{tpu_custom_call.1} parent=1 // pred_fallthru
      _
    %v52 = vld [vmem:[#allocation2] sm:$0xff]
    %v53 = vld [vmem:[#allocation2 + $0x8] sm:$0xff]
    %v54 = vld [vmem:[#allocation5] sm:$0xff]
    %v55 = vld [vmem:[#allocation5 + $0x8] sm:$0xff]
    %v56 = vld [vmem:[%s2] sm:$0xff]
    %v57 = vld [vmem:[%s2 + $0x8] sm:$0xff]
    %v58 = vld [vmem:[%s2 + $0x10] sm:$0xff]
    %v59 = vld [vmem:[%s2 + $0x18] sm:$0xff]
    %v60 = vld [vmem:[%s2 + $0x20] sm:$0xff]
    %v61 = vld [vmem:[%s2 + $0x28] sm:$0xff]
    %v62 = vld [vmem:[%s2 + $0x30] sm:$0xff]
    %v63 = vld [vmem:[%s2 + $0x38] sm:$0xff]
    %v64 = vld [vmem:[%s3] sm:$0xff]
    %v65 = vld [vmem:[%s3 + $0x10] sm:$0xff]
    %v66 = vld [vmem:[%s3 + $0x20] sm:$0xff]
    %v67 = vld [vmem:[%s3 + $0x30] sm:$0xff]
    %v68 = vld [vmem:[%s5] ss:$0 sm:$0xff]
    %vm69 = vcmask 261120
    %v71 = vsel %vm69, %v52, 0
    %v74 = vsel %vm69, %v53, 0
    %76 = vmatprep.subr.mxu0 0.0
    %77 = vmatpush1.msra.mxu0 0.0
    %78 = vmatprep.subr.mxu0 0.0
    %79 = vmatpush1.msra.mxu0 0.0
    %80 = vmatprep.subr.mxu0 0.0
    %81 = vmatpush1.msra.mxu0 0.0
    %82 = vmatprep.subr.mxu0 0.0
    %83 = vmatpush1.msra.mxu0 0.0
    %84 = vmatprep.subr.mxu0 0.0
    %85 = vmatpush1.msra.mxu0 0.0
    %86 = vmatprep.subr.mxu0 0.0
    %87 = vmatpush1.msra.mxu0 0.0
    %88 = vmatprep.subr.mxu0 0.0
    %89 = vmatpush1.msra.mxu0 0.0
    %90 = vmatprep.subr.mxu0 0.0
    %91 = vmatpush1.msra.mxu0 0.0
    %92 = vmatprep.subr.mxu0 0.0
    %93 = vmatpush1.msra.mxu0 0.0
    %94 = vmatprep.subr.mxu0 0.0
    %95 = vmatpush1.msra.mxu0 0.0
    %96 = vmatprep.subr.mxu0 0.0
    %97 = vmatpush1.msra.mxu0 0.0
    %98 = vmatprep.subr.mxu0 0.0
    %99 = vmatpush1.msra.mxu0 0.0
    %100 = vmatprep.subr.mxu0 0.0
    %101 = vmatpush1.msra.mxu0 %v67
    %102 = vmatprep.subr.mxu0 0.0
    %103 = vmatpush1.msra.mxu0 %v66
    %104 = vmatprep.subr.mxu0 0.0
    %105 = vmatpush1.msra.mxu0 %v65
    %106 = vmatprep.subr.mxu0 0.0
    %107 = vmatpush1.msra.mxu0 %v64
    %108 = vmatprep.subr.mxu0 0.0
    %109 = vmatpush2.msra.mxu0 0.0
    %110 = vmatprep.subr.mxu0 0.0
    %111 = vmatpush2.msra.mxu0 0.0
    %112 = vmatprep.subr.mxu0 0.0
    %113 = vmatpush2.msra.mxu0 0.0
    %114 = vmatprep.subr.mxu0 0.0
    %115 = vmatpush2.msra.mxu0 0.0
    %116 = vmatprep.subr.mxu0 0.0
    %117 = vmatpush2.msra.mxu0 0.0
    %118 = vmatprep.subr.mxu0 0.0
    %119 = vmatpush2.msra.mxu0 0.0
    %120 = vmatprep.subr.mxu0 0.0
    %121 = vmatpush2.msra.mxu0 0.0
    %122 = vmatprep.subr.mxu0 0.0
    %123 = vmatpush2.msra.mxu0 0.0
    %124 = vmatprep.subr.mxu0 0.0
    %125 = vmatpush2.msra.mxu0 0.0
    %126 = vmatprep.subr.mxu0 0.0
    %127 = vmatpush2.msra.mxu0 0.0
    %128 = vmatprep.subr.mxu0 0.0
    %129 = vmatpush2.msra.mxu0 0.0
    %130 = vmatprep.subr.mxu0 0.0
    %131 = vmatpush2.msra.mxu0 0.0
    %132 = vmatprep.subr.mxu0 0.0
    %133 = vmatpush2.msra.mxu0 0.0
    %134 = vmatprep.subr.mxu0 0.0
    %135 = vmatpush2.msra.mxu0 0.0
    %136 = vmatprep.subr.mxu0 0.0
    %137 = vmatpush2.msra.mxu0 0.0
    %138 = vmatprep.subr.mxu0 0.0
    %139 = vmatpush2.msra.mxu0 0.0
    %140 = vmatprep.mubr.f32.mxu0 0.0
    %141 = vmatmul.mubr.f32.gmra.mxu0 %v71
    %v142 = vpop.f32.mrf.mxu0
    %v143 = vadd.f32 %v68, %v142
    %v144 = vpop.f32.mrf.mxu0
    %145 = vmatprep.mubr.f32.mxu0 0.0
    %146 = vmatmul.mubr.f32.gmra.mxu0 %v74
    %v147 = vpop.f32.mrf.mxu0
    %v148 = vadd.f32 %v68, %v147
    %v149 = vpop.f32.mrf.mxu0
    %150 = vdwg.mxu0
    %v151 = vld [vmem:[%s5 + $0x10] ss:$0 sm:$0xff]
    %154 = vrot.lane.b32.xlu0 %v143, 120
    %v155 = vpop.permute.xlu0 %154
    %156 = vrot.lane.b32.xlu0 %v148, 120
    %v157 = vpop.permute.xlu0 %156
    %158 = vrot.lane.b32.xlu0 %v143, 112
    %v159 = vpop.permute.xlu0 %158
    %160 = vrot.lane.b32.xlu0 %v148, 112
    %v161 = vpop.permute.xlu0 %160
    %162 = vrot.lane.b32.xlu0 %v143, 104
    %v163 = vpop.permute.xlu0 %162
    %164 = vrot.lane.b32.xlu0 %v148, 104
    %v165 = vpop.permute.xlu0 %164
    %166 = vrot.lane.b32.xlu0 %v143, 96
    %v167 = vpop.permute.xlu0 %166
    %168 = vrot.lane.b32.xlu0 %v148, 96
    %v169 = vpop.permute.xlu0 %168
    %170 = vrot.lane.b32.xlu0 %v155, 96
    %v171 = vpop.permute.xlu0 %170
    %172 = vrot.lane.b32.xlu0 %v157, 96
    %v173 = vpop.permute.xlu0 %172
    %174 = vrot.lane.b32.xlu0 %v159, 96
    %v175 = vpop.permute.xlu0 %174
    %176 = vrot.lane.b32.xlu0 %v161, 96
    %v177 = vpop.permute.xlu0 %176
    %178 = vrot.lane.b32.xlu0 %v163, 96
    %v179 = vpop.permute.xlu0 %178
    %180 = vrot.lane.b32.xlu0 %v165, 96
    %v181 = vpop.permute.xlu0 %180
    %vm182 = vcmask 64512
    %v183 = vsel %vm182, %v143, 0
    %v185 = vsel %vm182, %v148, 0
    %v187 = vsel %vm182, %v155, 0
    %v189 = vsel %vm182, %v157, 0
    %v191 = vsel %vm182, %v159, 0
    %v193 = vsel %vm182, %v161, 0
    %v195 = vsel %vm182, %v163, 0
    %v197 = vsel %vm182, %v165, 0
    %v199 = vsel %vm182, %v167, 0
    %v201 = vsel %vm182, %v169, 0
    %v203 = vsel %vm182, %v171, 0
    %v205 = vsel %vm182, %v173, 0
    %v207 = vsel %vm182, %v175, 0
    %v209 = vsel %vm182, %v177, 0
    %v211 = vsel %vm182, %v179, 0
    %v213 = vsel %vm182, %v181, 0
    %215 = vmatprep.subr.mxu0 0.0
    %216 = vmatpush1.xpose.msra.mxu0 0.0
    %217 = vmatprep.subr.mxu0 0.0
    %218 = vmatpush1.xpose.msra.mxu0 0.0
    %219 = vmatprep.subr.mxu0 0.0
    %220 = vmatpush1.xpose.msra.mxu0 0.0
    %221 = vmatprep.subr.mxu0 0.0
    %222 = vmatpush1.xpose.msra.mxu0 0.0
    %223 = vmatprep.subr.mxu0 0.0
    %224 = vmatpush1.xpose.msra.mxu0 0.0
    %225 = vmatprep.subr.mxu0 0.0
    %226 = vmatpush1.xpose.msra.mxu0 0.0
    %227 = vmatprep.subr.mxu0 0.0
    %228 = vmatpush1.xpose.msra.mxu0 0.0
    %229 = vmatprep.subr.mxu0 0.0
    %230 = vmatpush1.xpose.msra.mxu0 0.0
    %231 = vmatprep.subr.mxu0 0.0
    %232 = vmatpush1.xpose.msra.mxu0 %v213
    %233 = vmatprep.subr.mxu0 0.0
    %234 = vmatpush1.xpose.msra.mxu0 %v211
    %235 = vmatprep.subr.mxu0 0.0
    %236 = vmatpush1.xpose.msra.mxu0 %v209
    %237 = vmatprep.subr.mxu0 0.0
    %238 = vmatpush1.xpose.msra.mxu0 %v207
    %239 = vmatprep.subr.mxu0 0.0
    %240 = vmatpush1.xpose.msra.mxu0 %v205
    %241 = vmatprep.subr.mxu0 0.0
    %242 = vmatpush1.xpose.msra.mxu0 %v203
    %243 = vmatprep.subr.mxu0 0.0
    %244 = vmatpush1.xpose.msra.mxu0 %v201
    %245 = vmatprep.subr.mxu0 0.0
    %246 = vmatpush1.xpose.msra.mxu0 %v199
    %247 = vmatprep.subr.mxu0 0.0
    %248 = vmatpush2.xpose.msra.mxu0 0.0
    %249 = vmatprep.subr.mxu0 0.0
    %250 = vmatpush2.xpose.msra.mxu0 0.0
    %251 = vmatprep.subr.mxu0 0.0
    %252 = vmatpush2.xpose.msra.mxu0 0.0
    %253 = vmatprep.subr.mxu0 0.0
    %254 = vmatpush2.xpose.msra.mxu0 0.0
    %255 = vmatprep.subr.mxu0 0.0
    %256 = vmatpush2.xpose.msra.mxu0 0.0
    %257 = vmatprep.subr.mxu0 0.0
    %258 = vmatpush2.xpose.msra.mxu0 0.0
    %259 = vmatprep.subr.mxu0 0.0
    %260 = vmatpush2.xpose.msra.mxu0 0.0
    %261 = vmatprep.subr.mxu0 0.0
    %262 = vmatpush2.xpose.msra.mxu0 0.0
    %263 = vmatprep.subr.mxu0 0.0
    %264 = vmatpush2.xpose.msra.mxu0 0.0
    %265 = vmatprep.subr.mxu0 0.0
    %266 = vmatpush2.xpose.msra.mxu0 0.0
    %267 = vmatprep.subr.mxu0 0.0
    %268 = vmatpush2.xpose.msra.mxu0 0.0
    %269 = vmatprep.subr.mxu0 0.0
    %270 = vmatpush2.xpose.msra.mxu0 0.0
    %271 = vmatprep.subr.mxu0 0.0
    %272 = vmatpush2.xpose.msra.mxu0 0.0
    %273 = vmatprep.subr.mxu0 0.0
    %274 = vmatpush2.xpose.msra.mxu0 0.0
    %275 = vmatprep.subr.mxu0 0.0
    %276 = vmatpush2.xpose.msra.mxu0 0.0
    %277 = vmatprep.subr.mxu0 0.0
    %278 = vmatpush2.xpose.msra.mxu0 0.0
    %279 = vmatprep.mubr.f32.mxu0 0.0
    %280 = vmatmul.mubr.f32.gmra.mxu0 %v183
    %v281 = vpop.f32.mrf.mxu0
    %v282 = vadd.f32 %v56, %v281
    %v283 = vpop.f32.mrf.mxu0
    %284 = vmatprep.mubr.f32.mxu0 0.0
    %285 = vmatmul.mubr.f32.gmra.mxu0 %v185
    %v286 = vpop.f32.mrf.mxu0
    %v287 = vadd.f32 %v57, %v286
    %v288 = vpop.f32.mrf.mxu0
    %289 = vmatprep.mubr.f32.mxu0 0.0
    %290 = vmatmul.mubr.f32.gmra.mxu0 %v187
    %v291 = vpop.f32.mrf.mxu0
    %v292 = vadd.f32 %v58, %v291
    %v293 = vpop.f32.mrf.mxu0
    %294 = vmatprep.mubr.f32.mxu0 0.0
    %295 = vmatmul.mubr.f32.gmra.mxu0 %v189
    %v296 = vpop.f32.mrf.mxu0
    %v297 = vadd.f32 %v59, %v296
    %v298 = vpop.f32.mrf.mxu0
    %299 = vmatprep.mubr.f32.mxu0 0.0
    %300 = vmatmul.mubr.f32.gmra.mxu0 %v191
    %v301 = vpop.f32.mrf.mxu0
    %v302 = vadd.f32 %v60, %v301
    %v303 = vpop.f32.mrf.mxu0
    %304 = vmatprep.mubr.f32.mxu0 0.0
    %305 = vmatmul.mubr.f32.gmra.mxu0 %v193
    %v306 = vpop.f32.mrf.mxu0
    %v307 = vadd.f32 %v61, %v306
    %v308 = vpop.f32.mrf.mxu0
    %309 = vmatprep.mubr.f32.mxu0 0.0
    %310 = vmatmul.mubr.f32.gmra.mxu0 %v195
    %v311 = vpop.f32.mrf.mxu0
    %v312 = vadd.f32 %v62, %v311
    %v313 = vpop.f32.mrf.mxu0
    %314 = vmatprep.mubr.f32.mxu0 0.0
    %315 = vmatmul.mubr.f32.gmra.mxu0 %v197
    %v316 = vpop.f32.mrf.mxu0
    %v317 = vadd.f32 %v63, %v316
    %v318 = vpop.f32.mrf.mxu0
    %319 = vdwg.mxu0
    %vm320 = vcmask 523264
    %v321 = vsel %vm320, %v282, -inf
    %322 = vmax.xlane.f32.xlu0 %v321
    %v323 = vpop.xlane.xlu0 %322
    %v324 = vsel %vm320, %v287, -inf
    %325 = vmax.xlane.f32.xlu0 %v324
    %v326 = vpop.xlane.xlu0 %325
    %v327 = vsel %vm320, %v292, -inf
    %328 = vmax.xlane.f32.xlu0 %v327
    %v329 = vpop.xlane.xlu0 %328
    %v330 = vsel %vm320, %v297, -inf
    %331 = vmax.xlane.f32.xlu0 %v330
    %v332 = vpop.xlane.xlu0 %331
    %v333 = vsel %vm320, %v302, -inf
    %334 = vmax.xlane.f32.xlu0 %v333
    %v335 = vpop.xlane.xlu0 %334
    %v336 = vsel %vm320, %v307, -inf
    %337 = vmax.xlane.f32.xlu0 %v336
    %v338 = vpop.xlane.xlu0 %337
    %v339 = vsel %vm320, %v312, -inf
    %340 = vmax.xlane.f32.xlu0 %v339
    %v341 = vpop.xlane.xlu0 %340
    %v342 = vsel %vm320, %v317, -inf
    %343 = vmax.xlane.f32.xlu0 %v342
    %v344 = vpop.xlane.xlu0 %343
    %v345 = vsub.f32 %v282, %v323
    %v346 = vsub.f32 %v287, %v326
    %v347 = vsub.f32 %v292, %v329
    %v348 = vsub.f32 %v297, %v332
    %v349 = vsub.f32 %v302, %v335
    %v350 = vsub.f32 %v307, %v338
    %v351 = vsub.f32 %v312, %v341
    %v352 = vsub.f32 %v317, %v344
    %v353 = vmul.f32 %v345, 1.442695
    %v354 = vpow.pop %v353
    %v355 = vmul.f32 %v346, 1.442695
    %v356 = vpow.pop %v355
    %v357 = vmul.f32 %v347, 1.442695
    %v358 = vpow.pop %v357
    %v359 = vmul.f32 %v348, 1.442695
    %v360 = vpow.pop %v359
    %v361 = vmul.f32 %v349, 1.442695
    %v362 = vpow.pop %v361
    %v363 = vmul.f32 %v350, 1.442695
    %v364 = vpow.pop %v363
    %v365 = vmul.f32 %v351, 1.442695
    %v366 = vpow.pop %v365
    %v367 = vmul.f32 %v352, 1.442695
    %v368 = vpow.pop %v367
    %v369 = vsel %vm320, %v354, 0.0
    %370 = vadd.xlane.f32.xlu0 %v369
    %v371 = vpop.xlane.xlu0 %370
    %v372 = vsel %vm320, %v356, 0.0
    %373 = vadd.xlane.f32.xlu0 %v372
    %v374 = vpop.xlane.xlu0 %373
    %v375 = vsel %vm320, %v358, 0.0
    %376 = vadd.xlane.f32.xlu0 %v375
    %v377 = vpop.xlane.xlu0 %376
    %v378 = vsel %vm320, %v360, 0.0
    %379 = vadd.xlane.f32.xlu0 %v378
    %v380 = vpop.xlane.xlu0 %379
    %v381 = vsel %vm320, %v362, 0.0
    %382 = vadd.xlane.f32.xlu0 %v381
    %v383 = vpop.xlane.xlu0 %382
    %v384 = vsel %vm320, %v364, 0.0
    %385 = vadd.xlane.f32.xlu0 %v384
    %v386 = vpop.xlane.xlu0 %385
    %v387 = vsel %vm320, %v366, 0.0
    %388 = vadd.xlane.f32.xlu0 %v387
    %v389 = vpop.xlane.xlu0 %388
    %v390 = vsel %vm320, %v368, 0.0
    %391 = vadd.xlane.f32.xlu0 %v390
    %v392 = vpop.xlane.xlu0 %391
    %v393 = vrcp.pop %v371
    %v394 = vrcp.pop %v374
    %v395 = vrcp.pop %v377
    %v396 = vrcp.pop %v380
    %v397 = vrcp.pop %v383
    %v398 = vrcp.pop %v386
    %v399 = vrcp.pop %v389
    %v400 = vrcp.pop %v392
    %v401 = vmul.f32 %v354, %v393
    %v402 = vmul.f32 %v356, %v394
    %v403 = vmul.f32 %v358, %v395
    %v404 = vmul.f32 %v360, %v396
    %v405 = vmul.f32 %v362, %v397
    %v406 = vmul.f32 %v364, %v398
    %v407 = vmul.f32 %v366, %v399
    %v408 = vmul.f32 %v368, %v400
    %409 = vrot.lane.b32.xlu0 %v143, 64
    %v410 = vpop.permute.xlu0 %409
    %411 = vrot.lane.b32.xlu0 %v148, 64
    %v412 = vpop.permute.xlu0 %411
    %413 = vrot.lane.b32.xlu0 %v155, 64
    %v414 = vpop.permute.xlu0 %413
    %415 = vrot.lane.b32.xlu0 %v157, 64
    %v416 = vpop.permute.xlu0 %415
    %417 = vrot.lane.b32.xlu0 %v159, 64
    %v418 = vpop.permute.xlu0 %417
    %419 = vrot.lane.b32.xlu0 %v161, 64
    %v420 = vpop.permute.xlu0 %419
    %421 = vrot.lane.b32.xlu0 %v163, 64
    %v422 = vpop.permute.xlu0 %421
    %423 = vrot.lane.b32.xlu0 %v165, 64
    %v424 = vpop.permute.xlu0 %423
    %v434 = vsel %vm320, %v401, 0
    %v437 = vsel %vm320, %v402, 0
    %v440 = vsel %vm320, %v403, 0
    %v443 = vsel %vm320, %v404, 0
    %v446 = vsel %vm320, %v405, 0
    %v449 = vsel %vm320, %v406, 0
    %v452 = vsel %vm320, %v407, 0
    %v455 = vsel %vm320, %v408, 0
    %457 = vmatprep.subr.mxu0 0.0
    %458 = vmatpush1.msra.mxu0 0.0
    %459 = vmatprep.subr.mxu0 0.0
    %460 = vmatpush1.msra.mxu0 0.0
    %461 = vmatprep.subr.mxu0 0.0
    %462 = vmatpush1.msra.mxu0 0.0
    %463 = vmatprep.subr.mxu0 0.0
    %464 = vmatpush1.msra.mxu0 0.0
    %465 = vmatprep.subr.mxu0 0.0
    %466 = vmatpush1.msra.mxu0 0.0
    %467 = vmatprep.subr.mxu0 0.0
    %468 = vmatpush1.msra.mxu0 0.0
    %469 = vmatprep.subr.mxu0 0.0
    %470 = vmatpush1.msra.mxu0 0.0
    %471 = vmatprep.subr.mxu0 0.0
    %472 = vmatpush1.msra.mxu0 0.0
    %473 = vmatprep.subr.mxu0 0.0
    %474 = vmatpush1.msra.mxu0 %v424
    %475 = vmatprep.subr.mxu0 0.0
    %476 = vmatpush1.msra.mxu0 %v422
    %477 = vmatprep.subr.mxu0 0.0
    %478 = vmatpush1.msra.mxu0 %v420
    %479 = vmatprep.subr.mxu0 0.0
    %480 = vmatpush1.msra.mxu0 %v418
    %481 = vmatprep.subr.mxu0 0.0
    %482 = vmatpush1.msra.mxu0 %v416
    %483 = vmatprep.subr.mxu0 0.0
    %484 = vmatpush1.msra.mxu0 %v414
    %485 = vmatprep.subr.mxu0 0.0
    %486 = vmatpush1.msra.mxu0 %v412
    %487 = vmatprep.subr.mxu0 0.0
    %488 = vmatpush1.msra.mxu0 %v410
    %489 = vmatprep.subr.mxu0 0.0
    %490 = vmatpush2.msra.mxu0 0.0
    %491 = vmatprep.subr.mxu0 0.0
    %492 = vmatpush2.msra.mxu0 0.0
    %493 = vmatprep.subr.mxu0 0.0
    %494 = vmatpush2.msra.mxu0 0.0
    %495 = vmatprep.subr.mxu0 0.0
    %496 = vmatpush2.msra.mxu0 0.0
    %497 = vmatprep.subr.mxu0 0.0
    %498 = vmatpush2.msra.mxu0 0.0
    %499 = vmatprep.subr.mxu0 0.0
    %500 = vmatpush2.msra.mxu0 0.0
    %501 = vmatprep.subr.mxu0 0.0
    %502 = vmatpush2.msra.mxu0 0.0
    %503 = vmatprep.subr.mxu0 0.0
    %504 = vmatpush2.msra.mxu0 0.0
    %505 = vmatprep.subr.mxu0 0.0
    %506 = vmatpush2.msra.mxu0 0.0
    %507 = vmatprep.subr.mxu0 0.0
    %508 = vmatpush2.msra.mxu0 0.0
    %509 = vmatprep.subr.mxu0 0.0
    %510 = vmatpush2.msra.mxu0 0.0
    %511 = vmatprep.subr.mxu0 0.0
    %512 = vmatpush2.msra.mxu0 0.0
    %513 = vmatprep.subr.mxu0 0.0
    %514 = vmatpush2.msra.mxu0 0.0
    %515 = vmatprep.subr.mxu0 0.0
    %516 = vmatpush2.msra.mxu0 0.0
    %517 = vmatprep.subr.mxu0 0.0
    %518 = vmatpush2.msra.mxu0 0.0
    %519 = vmatprep.subr.mxu0 0.0
    %520 = vmatpush2.msra.mxu0 0.0
    %521 = vmatprep.mubr.f32.mxu0 0.0
    %522 = vmatmul.mubr.f32.gmra.mxu0 %v434
    %v523 = vpop.f32.mrf.mxu0
    %v524 = vadd.f32 0.0, %v523
    %v525 = vpop.f32.mrf.mxu0
    %526 = vmatprep.mubr.f32.mxu0 0.0
    %527 = vmatmul.mubr.f32.gmra.mxu0 %v437
    %v528 = vpop.f32.mrf.mxu0
    %v529 = vadd.f32 0.0, %v528
    %v530 = vpop.f32.mrf.mxu0
    %531 = vmatprep.mubr.f32.mxu0 0.0
    %532 = vmatmul.mubr.f32.gmra.mxu0 %v440
    %v533 = vpop.f32.mrf.mxu0
    %v534 = vadd.f32 0.0, %v533
    %v535 = vpop.f32.mrf.mxu0
    %536 = vmatprep.mubr.f32.mxu0 0.0
    %537 = vmatmul.mubr.f32.gmra.mxu0 %v443
    %v538 = vpop.f32.mrf.mxu0
    %v539 = vadd.f32 0.0, %v538
    %v540 = vpop.f32.mrf.mxu0
    %541 = vmatprep.mubr.f32.mxu0 0.0
    %542 = vmatmul.mubr.f32.gmra.mxu0 %v446
    %v543 = vpop.f32.mrf.mxu0
    %v544 = vadd.f32 0.0, %v543
    %v545 = vpop.f32.mrf.mxu0
    %546 = vmatprep.mubr.f32.mxu0 0.0
    %547 = vmatmul.mubr.f32.gmra.mxu0 %v449
    %v548 = vpop.f32.mrf.mxu0
    %v549 = vadd.f32 0.0, %v548
    %v550 = vpop.f32.mrf.mxu0
    %551 = vmatprep.mubr.f32.mxu0 0.0
    %552 = vmatmul.mubr.f32.gmra.mxu0 %v452
    %v553 = vpop.f32.mrf.mxu0
    %v554 = vadd.f32 0.0, %v553
    %v555 = vpop.f32.mrf.mxu0
    %556 = vmatprep.mubr.f32.mxu0 0.0
    %557 = vmatmul.mubr.f32.gmra.mxu0 %v455
    %v558 = vpop.f32.mrf.mxu0
    %v559 = vadd.f32 0.0, %v558
    %v560 = vpop.f32.mrf.mxu0
    %561 = vdwg.mxu0
    %v562 = vld [vmem:[%s4] sm:$0xff]
    %v563 = vld [vmem:[%s4 + $0x8] sm:$0xff]
    %v565 = vsel %vm182, %v534, 0
    %v568 = vsel %vm182, %v539, 0
    %570 = vmatprep.subr.mxu0 0.0
    %571 = vmatpush1.msra.mxu0 0.0
    %572 = vmatprep.subr.mxu0 0.0
    %573 = vmatpush1.msra.mxu0 0.0
    %574 = vmatprep.subr.mxu0 0.0
    %575 = vmatpush1.msra.mxu0 0.0
    %576 = vmatprep.subr.mxu0 0.0
    %577 = vmatpush1.msra.mxu0 0.0
    %578 = vmatprep.subr.mxu0 0.0
    %579 = vmatpush1.msra.mxu0 0.0
    %580 = vmatprep.subr.mxu0 0.0
    %581 = vmatpush1.msra.mxu0 0.0
    %582 = vmatprep.subr.mxu0 0.0
    %583 = vmatpush1.msra.mxu0 0.0
    %584 = vmatprep.subr.mxu0 0.0
    %585 = vmatpush1.msra.mxu0 0.0
    %586 = vmatprep.subr.mxu0 0.0
    %587 = vmatpush1.msra.mxu0 0.0
    %588 = vmatprep.subr.mxu0 0.0
    %589 = vmatpush1.msra.mxu0 0.0
    %590 = vmatprep.subr.mxu0 0.0
    %591 = vmatpush1.msra.mxu0 0.0
    %592 = vmatprep.subr.mxu0 0.0
    %593 = vmatpush1.msra.mxu0 0.0
    %594 = vmatprep.subr.mxu0 0.0
    %595 = vmatpush1.msra.mxu0 0.0
    %596 = vmatprep.subr.mxu0 0.0
    %597 = vmatpush1.msra.mxu0 0.0
    %598 = vmatprep.subr.mxu0 0.0
    %599 = vmatpush1.msra.mxu0 0.0
    %600 = vmatprep.subr.mxu0 0.0
    %601 = vmatpush1.msra.mxu0 %v563
    %602 = vmatprep.subr.mxu0 0.0
    %603 = vmatpush2.msra.mxu0 0.0
    %604 = vmatprep.subr.mxu0 0.0
    %605 = vmatpush2.msra.mxu0 0.0
    %606 = vmatprep.subr.mxu0 0.0
    %607 = vmatpush2.msra.mxu0 0.0
    %608 = vmatprep.subr.mxu0 0.0
    %609 = vmatpush2.msra.mxu0 0.0
    %610 = vmatprep.subr.mxu0 0.0
    %611 = vmatpush2.msra.mxu0 0.0
    %612 = vmatprep.subr.mxu0 0.0
    %613 = vmatpush2.msra.mxu0 0.0
    %614 = vmatprep.subr.mxu0 0.0
    %615 = vmatpush2.msra.mxu0 0.0
    %616 = vmatprep.subr.mxu0 0.0
    %617 = vmatpush2.msra.mxu0 0.0
    %618 = vmatprep.subr.mxu0 0.0
    %619 = vmatpush2.msra.mxu0 0.0
    %620 = vmatprep.subr.mxu0 0.0
    %621 = vmatpush2.msra.mxu0 0.0
    %622 = vmatprep.subr.mxu0 0.0
    %623 = vmatpush2.msra.mxu0 0.0
    %624 = vmatprep.subr.mxu0 0.0
    %625 = vmatpush2.msra.mxu0 0.0
    %626 = vmatprep.subr.mxu0 0.0
    %627 = vmatpush2.msra.mxu0 0.0
    %628 = vmatprep.subr.mxu0 0.0
    %629 = vmatpush2.msra.mxu0 0.0
    %630 = vmatprep.subr.mxu0 0.0
    %631 = vmatpush2.msra.mxu0 0.0
    %632 = vmatprep.subr.mxu0 0.0
    %633 = vmatpush2.msra.mxu0 0.0
    %634 = vmatprep.mubr.f32.mxu0 0.0
    %635 = vmatmul.mubr.f32.gmra.mxu0 %v565
    %v636 = vpop.f32.mrf.mxu0
    %v637 = vadd.f32 0.0, %v636
    %v638 = vpop.f32.mrf.mxu0
    %639 = vmatprep.mubr.f32.mxu0 0.0
    %640 = vmatmul.mubr.f32.gmra.mxu0 %v568
    %v641 = vpop.f32.mrf.mxu0
    %v642 = vadd.f32 0.0, %v641
    %v643 = vpop.f32.mrf.mxu0
    %644 = vdwg.mxu0
    %v646 = vsel %vm182, %v524, 0
    %v649 = vsel %vm182, %v529, 0
    %651 = vmatprep.subr.mxu0 0.0
    %652 = vmatpush1.msra.mxu0 0.0
    %653 = vmatprep.subr.mxu0 0.0
    %654 = vmatpush1.msra.mxu0 0.0
    %655 = vmatprep.subr.mxu0 0.0
    %656 = vmatpush1.msra.mxu0 0.0
    %657 = vmatprep.subr.mxu0 0.0
    %658 = vmatpush1.msra.mxu0 0.0
    %659 = vmatprep.subr.mxu0 0.0
    %660 = vmatpush1.msra.mxu0 0.0
    %661 = vmatprep.subr.mxu0 0.0
    %662 = vmatpush1.msra.mxu0 0.0
    %663 = vmatprep.subr.mxu0 0.0
    %664 = vmatpush1.msra.mxu0 0.0
    %665 = vmatprep.subr.mxu0 0.0
    %666 = vmatpush1.msra.mxu0 0.0
    %667 = vmatprep.subr.mxu0 0.0
    %668 = vmatpush1.msra.mxu0 0.0
    %669 = vmatprep.subr.mxu0 0.0
    %670 = vmatpush1.msra.mxu0 0.0
    %671 = vmatprep.subr.mxu0 0.0
    %672 = vmatpush1.msra.mxu0 0.0
    %673 = vmatprep.subr.mxu0 0.0
    %674 = vmatpush1.msra.mxu0 0.0
    %675 = vmatprep.subr.mxu0 0.0
    %676 = vmatpush1.msra.mxu0 0.0
    %677 = vmatprep.subr.mxu0 0.0
    %678 = vmatpush1.msra.mxu0 0.0
    %679 = vmatprep.subr.mxu0 0.0
    %680 = vmatpush1.msra.mxu0 0.0
    %681 = vmatprep.subr.mxu0 0.0
    %682 = vmatpush1.msra.mxu0 %v562
    %683 = vmatprep.subr.mxu0 0.0
    %684 = vmatpush2.msra.mxu0 0.0
    %685 = vmatprep.subr.mxu0 0.0
    %686 = vmatpush2.msra.mxu0 0.0
    %687 = vmatprep.subr.mxu0 0.0
    %688 = vmatpush2.msra.mxu0 0.0
    %689 = vmatprep.subr.mxu0 0.0
    %690 = vmatpush2.msra.mxu0 0.0
    %691 = vmatprep.subr.mxu0 0.0
    %692 = vmatpush2.msra.mxu0 0.0
    %693 = vmatprep.subr.mxu0 0.0
    %694 = vmatpush2.msra.mxu0 0.0
    %695 = vmatprep.subr.mxu0 0.0
    %696 = vmatpush2.msra.mxu0 0.0
    %697 = vmatprep.subr.mxu0 0.0
    %698 = vmatpush2.msra.mxu0 0.0
    %699 = vmatprep.subr.mxu0 0.0
    %700 = vmatpush2.msra.mxu0 0.0
    %701 = vmatprep.subr.mxu0 0.0
    %702 = vmatpush2.msra.mxu0 0.0
    %703 = vmatprep.subr.mxu0 0.0
    %704 = vmatpush2.msra.mxu0 0.0
    %705 = vmatprep.subr.mxu0 0.0
    %706 = vmatpush2.msra.mxu0 0.0
    %707 = vmatprep.subr.mxu0 0.0
    %708 = vmatpush2.msra.mxu0 0.0
    %709 = vmatprep.subr.mxu0 0.0
    %710 = vmatpush2.msra.mxu0 0.0
    %711 = vmatprep.subr.mxu0 0.0
    %712 = vmatpush2.msra.mxu0 0.0
    %713 = vmatprep.subr.mxu0 0.0
    %714 = vmatpush2.msra.mxu0 0.0
    %715 = vmatprep.mubr.f32.mxu0 0.0
    %716 = vmatmul.mubr.f32.gmra.mxu0 %v646
    %v717 = vpop.f32.mrf.mxu0
    %v718 = vadd.f32 %v637, %v717
    %v719 = vpop.f32.mrf.mxu0
    %720 = vmatprep.mubr.f32.mxu0 0.0
    %721 = vmatmul.mubr.f32.gmra.mxu0 %v649
    %v722 = vpop.f32.mrf.mxu0
    %v723 = vadd.f32 %v642, %v722
    %v724 = vpop.f32.mrf.mxu0
    %725 = vdwg.mxu0
    %v726 = vld [vmem:[%s4 + $0x10] sm:$0xff]
    %v728 = vsel %vm182, %v544, 0
    %v731 = vsel %vm182, %v549, 0
    %733 = vmatprep.subr.mxu0 0.0
    %734 = vmatpush1.msra.mxu0 0.0
    %735 = vmatprep.subr.mxu0 0.0
    %736 = vmatpush1.msra.mxu0 0.0
    %737 = vmatprep.subr.mxu0 0.0
    %738 = vmatpush1.msra.mxu0 0.0
    %739 = vmatprep.subr.mxu0 0.0
    %740 = vmatpush1.msra.mxu0 0.0
    %741 = vmatprep.subr.mxu0 0.0
    %742 = vmatpush1.msra.mxu0 0.0
    %743 = vmatprep.subr.mxu0 0.0
    %744 = vmatpush1.msra.mxu0 0.0
    %745 = vmatprep.subr.mxu0 0.0
    %746 = vmatpush1.msra.mxu0 0.0
    %747 = vmatprep.subr.mxu0 0.0
    %748 = vmatpush1.msra.mxu0 0.0
    %749 = vmatprep.subr.mxu0 0.0
    %750 = vmatpush1.msra.mxu0 0.0
    %751 = vmatprep.subr.mxu0 0.0
    %752 = vmatpush1.msra.mxu0 0.0
    %753 = vmatprep.subr.mxu0 0.0
    %754 = vmatpush1.msra.mxu0 0.0
    %755 = vmatprep.subr.mxu0 0.0
    %756 = vmatpush1.msra.mxu0 0.0
    %757 = vmatprep.subr.mxu0 0.0
    %758 = vmatpush1.msra.mxu0 0.0
    %759 = vmatprep.subr.mxu0 0.0
    %760 = vmatpush1.msra.mxu0 0.0
    %761 = vmatprep.subr.mxu0 0.0
    %762 = vmatpush1.msra.mxu0 0.0
    %763 = vmatprep.subr.mxu0 0.0
    %764 = vmatpush1.msra.mxu0 %v726
    %765 = vmatprep.subr.mxu0 0.0
    %766 = vmatpush2.msra.mxu0 0.0
    %767 = vmatprep.subr.mxu0 0.0
    %768 = vmatpush2.msra.mxu0 0.0
    %769 = vmatprep.subr.mxu0 0.0
    %770 = vmatpush2.msra.mxu0 0.0
    %771 = vmatprep.subr.mxu0 0.0
    %772 = vmatpush2.msra.mxu0 0.0
    %773 = vmatprep.subr.mxu0 0.0
    %774 = vmatpush2.msra.mxu0 0.0
    %775 = vmatprep.subr.mxu0 0.0
    %776 = vmatpush2.msra.mxu0 0.0
    %777 = vmatprep.subr.mxu0 0.0
    %778 = vmatpush2.msra.mxu0 0.0
    %779 = vmatprep.subr.mxu0 0.0
    %780 = vmatpush2.msra.mxu0 0.0
    %781 = vmatprep.subr.mxu0 0.0
    %782 = vmatpush2.msra.mxu0 0.0
    %783 = vmatprep.subr.mxu0 0.0
    %784 = vmatpush2.msra.mxu0 0.0
    %785 = vmatprep.subr.mxu0 0.0
    %786 = vmatpush2.msra.mxu0 0.0
    %787 = vmatprep.subr.mxu0 0.0
    %788 = vmatpush2.msra.mxu0 0.0
    %789 = vmatprep.subr.mxu0 0.0
    %790 = vmatpush2.msra.mxu0 0.0
    %791 = vmatprep.subr.mxu0 0.0
    %792 = vmatpush2.msra.mxu0 0.0
    %793 = vmatprep.subr.mxu0 0.0
    %794 = vmatpush2.msra.mxu0 0.0
    %795 = vmatprep.subr.mxu0 0.0
    %796 = vmatpush2.msra.mxu0 0.0
    %797 = vmatprep.mubr.f32.mxu0 0.0
    %798 = vmatmul.mubr.f32.gmra.mxu0 %v728
    %v799 = vpop.f32.mrf.mxu0
    %v800 = vadd.f32 0.0, %v799
    %v801 = vpop.f32.mrf.mxu0
    %802 = vmatprep.mubr.f32.mxu0 0.0
    %803 = vmatmul.mubr.f32.gmra.mxu0 %v731
    %v804 = vpop.f32.mrf.mxu0
    %v805 = vadd.f32 0.0, %v804
    %v806 = vpop.f32.mrf.mxu0
    %807 = vdwg.mxu0
    %v808 = vadd.f32 %v718, %v800
    %v809 = vadd.f32 %v723, %v805
    %v810 = vld [vmem:[%s4 + $0x18] sm:$0xff]
    %v812 = vsel %vm182, %v554, 0
    %v815 = vsel %vm182, %v559, 0
    %817 = vmatprep.subr.mxu0 0.0
    %818 = vmatpush1.msra.mxu0 0.0
    %819 = vmatprep.subr.mxu0 0.0
    %820 = vmatpush1.msra.mxu0 0.0
    %821 = vmatprep.subr.mxu0 0.0
    %822 = vmatpush1.msra.mxu0 0.0
    %823 = vmatprep.subr.mxu0 0.0
    %824 = vmatpush1.msra.mxu0 0.0
    %825 = vmatprep.subr.mxu0 0.0
    %826 = vmatpush1.msra.mxu0 0.0
    %827 = vmatprep.subr.mxu0 0.0
    %828 = vmatpush1.msra.mxu0 0.0
    %829 = vmatprep.subr.mxu0 0.0
    %830 = vmatpush1.msra.mxu0 0.0
    %831 = vmatprep.subr.mxu0 0.0
    %832 = vmatpush1.msra.mxu0 0.0
    %833 = vmatprep.subr.mxu0 0.0
    %834 = vmatpush1.msra.mxu0 0.0
    %835 = vmatprep.subr.mxu0 0.0
    %836 = vmatpush1.msra.mxu0 0.0
    %837 = vmatprep.subr.mxu0 0.0
    %838 = vmatpush1.msra.mxu0 0.0
    %839 = vmatprep.subr.mxu0 0.0
    %840 = vmatpush1.msra.mxu0 0.0
    %841 = vmatprep.subr.mxu0 0.0
    %842 = vmatpush1.msra.mxu0 0.0
    %843 = vmatprep.subr.mxu0 0.0
    %844 = vmatpush1.msra.mxu0 0.0
    %845 = vmatprep.subr.mxu0 0.0
    %846 = vmatpush1.msra.mxu0 0.0
    %847 = vmatprep.subr.mxu0 0.0
    %848 = vmatpush1.msra.mxu0 %v810
    %849 = vmatprep.subr.mxu0 0.0
    %850 = vmatpush2.msra.mxu0 0.0
    %851 = vmatprep.subr.mxu0 0.0
    %852 = vmatpush2.msra.mxu0 0.0
    %853 = vmatprep.subr.mxu0 0.0
    %854 = vmatpush2.msra.mxu0 0.0
    %855 = vmatprep.subr.mxu0 0.0
    %856 = vmatpush2.msra.mxu0 0.0
    %857 = vmatprep.subr.mxu0 0.0
    %858 = vmatpush2.msra.mxu0 0.0
    %859 = vmatprep.subr.mxu0 0.0
    %860 = vmatpush2.msra.mxu0 0.0
    %861 = vmatprep.subr.mxu0 0.0
    %862 = vmatpush2.msra.mxu0 0.0
    %863 = vmatprep.subr.mxu0 0.0
    %864 = vmatpush2.msra.mxu0 0.0
    %865 = vmatprep.subr.mxu0 0.0
    %866 = vmatpush2.msra.mxu0 0.0
    %867 = vmatprep.subr.mxu0 0.0
    %868 = vmatpush2.msra.mxu0 0.0
    %869 = vmatprep.subr.mxu0 0.0
    %870 = vmatpush2.msra.mxu0 0.0
    %871 = vmatprep.subr.mxu0 0.0
    %872 = vmatpush2.msra.mxu0 0.0
    %873 = vmatprep.subr.mxu0 0.0
    %874 = vmatpush2.msra.mxu0 0.0
    %875 = vmatprep.subr.mxu0 0.0
    %876 = vmatpush2.msra.mxu0 0.0
    %877 = vmatprep.subr.mxu0 0.0
    %878 = vmatpush2.msra.mxu0 0.0
    %879 = vmatprep.subr.mxu0 0.0
    %880 = vmatpush2.msra.mxu0 0.0
    %881 = vmatprep.mubr.f32.mxu0 0.0
    %882 = vmatmul.mubr.f32.gmra.mxu0 %v812
    %v883 = vpop.f32.mrf.mxu0
    %v884 = vadd.f32 0.0, %v883
    %v885 = vpop.f32.mrf.mxu0
    %886 = vmatprep.mubr.f32.mxu0 0.0
    %887 = vmatmul.mubr.f32.gmra.mxu0 %v815
    %v888 = vpop.f32.mrf.mxu0
    %v889 = vadd.f32 0.0, %v888
    %v890 = vpop.f32.mrf.mxu0
    %891 = vdwg.mxu0
    %v892 = vadd.f32 %v808, %v884
    %v893 = vadd.f32 %v809, %v889
    %v894 = vadd.f32 %v892, %v151
    %v895 = vadd.f32 %v893, %v151
    %v896 = vadd.f32 %v52, %v894
    %v897 = vadd.f32 %v53, %v895
    %v898 = vld [vmem:[%s5 + $0x1] ss:$0 sm:$0xff]
    %v899 = vld [vmem:[%s5 + $0x2] ss:$0 sm:$0xff]
    %v900 = vsel %vm69, %v896, 0.0
    %901 = vadd.xlane.f32.xlu0 %v900
    %v902 = vpop.xlane.xlu0 %901
    %v903 = vsel %vm69, %v897, 0.0
    %904 = vadd.xlane.f32.xlu0 %v903
    %v905 = vpop.xlane.xlu0 %904
    %v906 = vrcp.pop 32.0
    %v907 = vmul.f32 %v902, %v906
    %v908 = vmul.f32 %v905, %v906
    %v909 = vsub.f32 %v896, %v907
    %v910 = vsub.f32 %v897, %v908
    %v911 = vmul.f32 %v909, %v909
    %v912 = vmul.f32 %v910, %v910
    %v913 = vsel %vm69, %v911, 0.0
    %914 = vadd.xlane.f32.xlu0 %v913
    %v915 = vpop.xlane.xlu0 %914
    %v916 = vsel %vm69, %v912, 0.0
    %917 = vadd.xlane.f32.xlu0 %v916
    %v918 = vpop.xlane.xlu0 %917
    %v919 = vmul.f32 %v915, %v906
    %v920 = vmul.f32 %v918, %v906
    %v921 = vadd.f32 %v919, 1e-05
    %v922 = vadd.f32 %v920, 1e-05
    %v923 = vrsqrt.pop %v921
    %v924 = vrsqrt.pop %v922
    %v925 = vmul.f32 %v909, %v923
    %v926 = vmul.f32 %v910, %v924
    %v927 = vmul.f32 %v925, %v898
    %v928 = vmul.f32 %v926, %v898
    %v929 = vadd.f32 %v927, %v899
    %v930 = vadd.f32 %v928, %v899
    %935 = vrot.lane.b32.xlu0 %v64, 32
    %v936 = vpop.permute.xlu0 %935
    %937 = vrot.lane.b32.xlu0 %v65, 32
    %v938 = vpop.permute.xlu0 %937
    %939 = vrot.lane.b32.xlu0 %v66, 32
    %v940 = vpop.permute.xlu0 %939
    %941 = vrot.lane.b32.xlu0 %v67, 32
    %v942 = vpop.permute.xlu0 %941
    %948 = vrot.lane.b32.xlu0 %v68, 32
    %v949 = vpop.permute.xlu0 %948
    %v952 = vsel %vm69, %v929, 0
    %v955 = vsel %vm69, %v930, 0
    %957 = vmatprep.subr.mxu0 0.0
    %958 = vmatpush1.msra.mxu0 0.0
    %959 = vmatprep.subr.mxu0 0.0
    %960 = vmatpush1.msra.mxu0 0.0
    %961 = vmatprep.subr.mxu0 0.0
    %962 = vmatpush1.msra.mxu0 0.0
    %963 = vmatprep.subr.mxu0 0.0
    %964 = vmatpush1.msra.mxu0 0.0
    %965 = vmatprep.subr.mxu0 0.0
    %966 = vmatpush1.msra.mxu0 0.0
    %967 = vmatprep.subr.mxu0 0.0
    %968 = vmatpush1.msra.mxu0 0.0
    %969 = vmatprep.subr.mxu0 0.0
    %970 = vmatpush1.msra.mxu0 0.0
    %971 = vmatprep.subr.mxu0 0.0
    %972 = vmatpush1.msra.mxu0 0.0
    %973 = vmatprep.subr.mxu0 0.0
    %974 = vmatpush1.msra.mxu0 0.0
    %975 = vmatprep.subr.mxu0 0.0
    %976 = vmatpush1.msra.mxu0 0.0
    %977 = vmatprep.subr.mxu0 0.0
    %978 = vmatpush1.msra.mxu0 0.0
    %979 = vmatprep.subr.mxu0 0.0
    %980 = vmatpush1.msra.mxu0 0.0
    %981 = vmatprep.subr.mxu0 0.0
    %982 = vmatpush1.msra.mxu0 %v942
    %983 = vmatprep.subr.mxu0 0.0
    %984 = vmatpush1.msra.mxu0 %v940
    %985 = vmatprep.subr.mxu0 0.0
    %986 = vmatpush1.msra.mxu0 %v938
    %987 = vmatprep.subr.mxu0 0.0
    %988 = vmatpush1.msra.mxu0 %v936
    %989 = vmatprep.subr.mxu0 0.0
    %990 = vmatpush2.msra.mxu0 0.0
    %991 = vmatprep.subr.mxu0 0.0
    %992 = vmatpush2.msra.mxu0 0.0
    %993 = vmatprep.subr.mxu0 0.0
    %994 = vmatpush2.msra.mxu0 0.0
    %995 = vmatprep.subr.mxu0 0.0
    %996 = vmatpush2.msra.mxu0 0.0
    %997 = vmatprep.subr.mxu0 0.0
    %998 = vmatpush2.msra.mxu0 0.0
    %999 = vmatprep.subr.mxu0 0.0
    %1000 = vmatpush2.msra.mxu0 0.0
    %1001 = vmatprep.subr.mxu0 0.0
    %1002 = vmatpush2.msra.mxu0 0.0
    %1003 = vmatprep.subr.mxu0 0.0
    %1004 = vmatpush2.msra.mxu0 0.0
    %1005 = vmatprep.subr.mxu0 0.0
    %1006 = vmatpush2.msra.mxu0 0.0
    %1007 = vmatprep.subr.mxu0 0.0
    %1008 = vmatpush2.msra.mxu0 0.0
    %1009 = vmatprep.subr.mxu0 0.0
    %1010 = vmatpush2.msra.mxu0 0.0
    %1011 = vmatprep.subr.mxu0 0.0
    %1012 = vmatpush2.msra.mxu0 0.0
    %1013 = vmatprep.subr.mxu0 0.0
    %1014 = vmatpush2.msra.mxu0 0.0
    %1015 = vmatprep.subr.mxu0 0.0
    %1016 = vmatpush2.msra.mxu0 0.0
    %1017 = vmatprep.subr.mxu0 0.0
    %1018 = vmatpush2.msra.mxu0 0.0
    %1019 = vmatprep.subr.mxu0 0.0
    %1020 = vmatpush2.msra.mxu0 0.0
    %1021 = vmatprep.mubr.f32.mxu0 0.0
    %1022 = vmatmul.mubr.f32.gmra.mxu0 %v952
    %v1023 = vpop.f32.mrf.mxu0
    %v1024 = vadd.f32 %v949, %v1023
    %v1025 = vpop.f32.mrf.mxu0
    %1026 = vmatprep.mubr.f32.mxu0 0.0
    %1027 = vmatmul.mubr.f32.gmra.mxu0 %v955
    %v1028 = vpop.f32.mrf.mxu0
    %v1029 = vadd.f32 %v949, %v1028
    %v1030 = vpop.f32.mrf.mxu0
    %1031 = vdwg.mxu0
    %v1032 = vld [vmem:[%s3 + $0x8] sm:$0xff]
    %v1033 = vld [vmem:[%s3 + $0x18] sm:$0xff]
    %v1034 = vld [vmem:[%s3 + $0x28] sm:$0xff]
    %v1035 = vld [vmem:[%s3 + $0x38] sm:$0xff]
    %v1036 = vld [vmem:[%s5 + $0x8] ss:$0 sm:$0xff]
    %v1038 = vsel %vm69, %v54, 0
    %v1041 = vsel %vm69, %v55, 0
    %1043 = vmatprep.subr.mxu0 0.0
    %1044 = vmatpush1.msra.mxu0 0.0
    %1045 = vmatprep.subr.mxu0 0.0
    %1046 = vmatpush1.msra.mxu0 0.0
    %1047 = vmatprep.subr.mxu0 0.0
    %1048 = vmatpush1.msra.mxu0 0.0
    %1049 = vmatprep.subr.mxu0 0.0
    %1050 = vmatpush1.msra.mxu0 0.0
    %1051 = vmatprep.subr.mxu0 0.0
    %1052 = vmatpush1.msra.mxu0 0.0
    %1053 = vmatprep.subr.mxu0 0.0
    %1054 = vmatpush1.msra.mxu0 0.0
    %1055 = vmatprep.subr.mxu0 0.0
    %1056 = vmatpush1.msra.mxu0 0.0
    %1057 = vmatprep.subr.mxu0 0.0
    %1058 = vmatpush1.msra.mxu0 0.0
    %1059 = vmatprep.subr.mxu0 0.0
    %1060 = vmatpush1.msra.mxu0 0.0
    %1061 = vmatprep.subr.mxu0 0.0
    %1062 = vmatpush1.msra.mxu0 0.0
    %1063 = vmatprep.subr.mxu0 0.0
    %1064 = vmatpush1.msra.mxu0 0.0
    %1065 = vmatprep.subr.mxu0 0.0
    %1066 = vmatpush1.msra.mxu0 0.0
    %1067 = vmatprep.subr.mxu0 0.0
    %1068 = vmatpush1.msra.mxu0 %v1035
    %1069 = vmatprep.subr.mxu0 0.0
    %1070 = vmatpush1.msra.mxu0 %v1034
    %1071 = vmatprep.subr.mxu0 0.0
    %1072 = vmatpush1.msra.mxu0 %v1033
    %1073 = vmatprep.subr.mxu0 0.0
    %1074 = vmatpush1.msra.mxu0 %v1032
    %1075 = vmatprep.subr.mxu0 0.0
    %1076 = vmatpush2.msra.mxu0 0.0
    %1077 = vmatprep.subr.mxu0 0.0
    %1078 = vmatpush2.msra.mxu0 0.0
    %1079 = vmatprep.subr.mxu0 0.0
    %1080 = vmatpush2.msra.mxu0 0.0
    %1081 = vmatprep.subr.mxu0 0.0
    %1082 = vmatpush2.msra.mxu0 0.0
    %1083 = vmatprep.subr.mxu0 0.0
    %1084 = vmatpush2.msra.mxu0 0.0
    %1085 = vmatprep.subr.mxu0 0.0
    %1086 = vmatpush2.msra.mxu0 0.0
    %1087 = vmatprep.subr.mxu0 0.0
    %1088 = vmatpush2.msra.mxu0 0.0
    %1089 = vmatprep.subr.mxu0 0.0
    %1090 = vmatpush2.msra.mxu0 0.0
    %1091 = vmatprep.subr.mxu0 0.0
    %1092 = vmatpush2.msra.mxu0 0.0
    %1093 = vmatprep.subr.mxu0 0.0
    %1094 = vmatpush2.msra.mxu0 0.0
    %1095 = vmatprep.subr.mxu0 0.0
    %1096 = vmatpush2.msra.mxu0 0.0
    %1097 = vmatprep.subr.mxu0 0.0
    %1098 = vmatpush2.msra.mxu0 0.0
    %1099 = vmatprep.subr.mxu0 0.0
    %1100 = vmatpush2.msra.mxu0 0.0
    %1101 = vmatprep.subr.mxu0 0.0
    %1102 = vmatpush2.msra.mxu0 0.0
    %1103 = vmatprep.subr.mxu0 0.0
    %1104 = vmatpush2.msra.mxu0 0.0
    %1105 = vmatprep.subr.mxu0 0.0
    %1106 = vmatpush2.msra.mxu0 0.0
    %1107 = vmatprep.mubr.f32.mxu0 0.0
    %1108 = vmatmul.mubr.f32.gmra.mxu0 %v1038
    %v1109 = vpop.f32.mrf.mxu0
    %v1110 = vadd.f32 %v1036, %v1109
    %v1111 = vpop.f32.mrf.mxu0
    %1112 = vmatprep.mubr.f32.mxu0 0.0
    %1113 = vmatmul.mubr.f32.gmra.mxu0 %v1041
    %v1114 = vpop.f32.mrf.mxu0
    %v1115 = vadd.f32 %v1036, %v1114
    %v1116 = vpop.f32.mrf.mxu0
    %1117 = vdwg.mxu0
    %1120 = vrot.lane.b32.xlu0 %v1024, 120
    %v1121 = vpop.permute.xlu0 %1120
    %1122 = vrot.lane.b32.xlu0 %v1029, 120
    %v1123 = vpop.permute.xlu0 %1122
    %1124 = vrot.lane.b32.xlu0 %v1024, 112
    %v1125 = vpop.permute.xlu0 %1124
    %1126 = vrot.lane.b32.xlu0 %v1029, 112
    %v1127 = vpop.permute.xlu0 %1126
    %1128 = vrot.lane.b32.xlu0 %v1024, 104
    %v1129 = vpop.permute.xlu0 %1128
    %1130 = vrot.lane.b32.xlu0 %v1029, 104
    %v1131 = vpop.permute.xlu0 %1130
    %1134 = vrot.lane.b32.xlu0 %v1110, 120
    %v1135 = vpop.permute.xlu0 %1134
    %1136 = vrot.lane.b32.xlu0 %v1115, 120
    %v1137 = vpop.permute.xlu0 %1136
    %1138 = vrot.lane.b32.xlu0 %v1110, 112
    %v1139 = vpop.permute.xlu0 %1138
    %1140 = vrot.lane.b32.xlu0 %v1115, 112
    %v1141 = vpop.permute.xlu0 %1140
    %1142 = vrot.lane.b32.xlu0 %v1110, 104
    %v1143 = vpop.permute.xlu0 %1142
    %1144 = vrot.lane.b32.xlu0 %v1115, 104
    %v1145 = vpop.permute.xlu0 %1144
    %1154 = vrot.lane.b32.xlu0 %v56, 64
    %v1155 = vpop.permute.xlu0 %1154
    %1156 = vrot.lane.b32.xlu0 %v57, 64
    %v1157 = vpop.permute.xlu0 %1156
    %1158 = vrot.lane.b32.xlu0 %v58, 64
    %v1159 = vpop.permute.xlu0 %1158
    %1160 = vrot.lane.b32.xlu0 %v59, 64
    %v1161 = vpop.permute.xlu0 %1160
    %1162 = vrot.lane.b32.xlu0 %v60, 64
    %v1163 = vpop.permute.xlu0 %1162
    %1164 = vrot.lane.b32.xlu0 %v61, 64
    %v1165 = vpop.permute.xlu0 %1164
    %1166 = vrot.lane.b32.xlu0 %v62, 64
    %v1167 = vpop.permute.xlu0 %1166
    %1168 = vrot.lane.b32.xlu0 %v63, 64
    %v1169 = vpop.permute.xlu0 %1168
    %v1178 = vsel %vm182, %v1024, 0
    %v1180 = vsel %vm182, %v1029, 0
    %v1182 = vsel %vm182, %v1121, 0
    %v1184 = vsel %vm182, %v1123, 0
    %v1186 = vsel %vm182, %v1125, 0
    %v1188 = vsel %vm182, %v1127, 0
    %v1190 = vsel %vm182, %v1129, 0
    %v1192 = vsel %vm182, %v1131, 0
    %v1194 = vsel %vm182, %v1110, 0
    %v1196 = vsel %vm182, %v1115, 0
    %v1198 = vsel %vm182, %v1135, 0
    %v1200 = vsel %vm182, %v1137, 0
    %v1202 = vsel %vm182, %v1139, 0
    %v1204 = vsel %vm182, %v1141, 0
    %v1206 = vsel %vm182, %v1143, 0
    %v1208 = vsel %vm182, %v1145, 0
    %1210 = vmatprep.subr.mxu0 0.0
    %1211 = vmatpush1.xpose.msra.mxu0 0.0
    %1212 = vmatprep.subr.mxu0 0.0
    %1213 = vmatpush1.xpose.msra.mxu0 0.0
    %1214 = vmatprep.subr.mxu0 0.0
    %1215 = vmatpush1.xpose.msra.mxu0 0.0
    %1216 = vmatprep.subr.mxu0 0.0
    %1217 = vmatpush1.xpose.msra.mxu0 0.0
    %1218 = vmatprep.subr.mxu0 0.0
    %1219 = vmatpush1.xpose.msra.mxu0 0.0
    %1220 = vmatprep.subr.mxu0 0.0
    %1221 = vmatpush1.xpose.msra.mxu0 0.0
    %1222 = vmatprep.subr.mxu0 0.0
    %1223 = vmatpush1.xpose.msra.mxu0 0.0
    %1224 = vmatprep.subr.mxu0 0.0
    %1225 = vmatpush1.xpose.msra.mxu0 0.0
    %1226 = vmatprep.subr.mxu0 0.0
    %1227 = vmatpush1.xpose.msra.mxu0 %v1208
    %1228 = vmatprep.subr.mxu0 0.0
    %1229 = vmatpush1.xpose.msra.mxu0 %v1206
    %1230 = vmatprep.subr.mxu0 0.0
    %1231 = vmatpush1.xpose.msra.mxu0 %v1204
    %1232 = vmatprep.subr.mxu0 0.0
    %1233 = vmatpush1.xpose.msra.mxu0 %v1202
    %1234 = vmatprep.subr.mxu0 0.0
    %1235 = vmatpush1.xpose.msra.mxu0 %v1200
    %1236 = vmatprep.subr.mxu0 0.0
    %1237 = vmatpush1.xpose.msra.mxu0 %v1198
    %1238 = vmatprep.subr.mxu0 0.0
    %1239 = vmatpush1.xpose.msra.mxu0 %v1196
    %1240 = vmatprep.subr.mxu0 0.0
    %1241 = vmatpush1.xpose.msra.mxu0 %v1194
    %1242 = vmatprep.subr.mxu0 0.0
    %1243 = vmatpush2.xpose.msra.mxu0 0.0
    %1244 = vmatprep.subr.mxu0 0.0
    %1245 = vmatpush2.xpose.msra.mxu0 0.0
    %1246 = vmatprep.subr.mxu0 0.0
    %1247 = vmatpush2.xpose.msra.mxu0 0.0
    %1248 = vmatprep.subr.mxu0 0.0
    %1249 = vmatpush2.xpose.msra.mxu0 0.0
    %1250 = vmatprep.subr.mxu0 0.0
    %1251 = vmatpush2.xpose.msra.mxu0 0.0
    %1252 = vmatprep.subr.mxu0 0.0
    %1253 = vmatpush2.xpose.msra.mxu0 0.0
    %1254 = vmatprep.subr.mxu0 0.0
    %1255 = vmatpush2.xpose.msra.mxu0 0.0
    %1256 = vmatprep.subr.mxu0 0.0
    %1257 = vmatpush2.xpose.msra.mxu0 0.0
    %1258 = vmatprep.subr.mxu0 0.0
    %1259 = vmatpush2.xpose.msra.mxu0 0.0
    %1260 = vmatprep.subr.mxu0 0.0
    %1261 = vmatpush2.xpose.msra.mxu0 0.0
    %1262 = vmatprep.subr.mxu0 0.0
    %1263 = vmatpush2.xpose.msra.mxu0 0.0
    %1264 = vmatprep.subr.mxu0 0.0
    %1265 = vmatpush2.xpose.msra.mxu0 0.0
    %1266 = vmatprep.subr.mxu0 0.0
    %1267 = vmatpush2.xpose.msra.mxu0 0.0
    %1268 = vmatprep.subr.mxu0 0.0
    %1269 = vmatpush2.xpose.msra.mxu0 0.0
    %1270 = vmatprep.subr.mxu0 0.0
    %1271 = vmatpush2.xpose.msra.mxu0 0.0
    %1272 = vmatprep.subr.mxu0 0.0
    %1273 = vmatpush2.xpose.msra.mxu0 0.0
    %1274 = vmatprep.mubr.f32.mxu0 0.0
    %1275 = vmatmul.mubr.f32.gmra.mxu0 %v1178
    %v1276 = vpop.f32.mrf.mxu0
    %v1277 = vadd.f32 %v1155, %v1276
    %v1278 = vpop.f32.mrf.mxu0
    %1279 = vmatprep.mubr.f32.mxu0 0.0
    %1280 = vmatmul.mubr.f32.gmra.mxu0 %v1180
    %v1281 = vpop.f32.mrf.mxu0
    %v1282 = vadd.f32 %v1157, %v1281
    %v1283 = vpop.f32.mrf.mxu0
    %1284 = vmatprep.mubr.f32.mxu0 0.0
    %1285 = vmatmul.mubr.f32.gmra.mxu0 %v1182
    %v1286 = vpop.f32.mrf.mxu0
    %v1287 = vadd.f32 %v1159, %v1286
    %v1288 = vpop.f32.mrf.mxu0
    %1289 = vmatprep.mubr.f32.mxu0 0.0
    %1290 = vmatmul.mubr.f32.gmra.mxu0 %v1184
    %v1291 = vpop.f32.mrf.mxu0
    %v1292 = vadd.f32 %v1161, %v1291
    %v1293 = vpop.f32.mrf.mxu0
    %1294 = vmatprep.mubr.f32.mxu0 0.0
    %1295 = vmatmul.mubr.f32.gmra.mxu0 %v1186
    %v1296 = vpop.f32.mrf.mxu0
    %v1297 = vadd.f32 %v1163, %v1296
    %v1298 = vpop.f32.mrf.mxu0
    %1299 = vmatprep.mubr.f32.mxu0 0.0
    %1300 = vmatmul.mubr.f32.gmra.mxu0 %v1188
    %v1301 = vpop.f32.mrf.mxu0
    %v1302 = vadd.f32 %v1165, %v1301
    %v1303 = vpop.f32.mrf.mxu0
    %1304 = vmatprep.mubr.f32.mxu0 0.0
    %1305 = vmatmul.mubr.f32.gmra.mxu0 %v1190
    %v1306 = vpop.f32.mrf.mxu0
    %v1307 = vadd.f32 %v1167, %v1306
    %v1308 = vpop.f32.mrf.mxu0
    %1309 = vmatprep.mubr.f32.mxu0 0.0
    %1310 = vmatmul.mubr.f32.gmra.mxu0 %v1192
    %v1311 = vpop.f32.mrf.mxu0
    %v1312 = vadd.f32 %v1169, %v1311
    %v1313 = vpop.f32.mrf.mxu0
    %1314 = vdwg.mxu0
    %v1315 = vsel %vm320, %v1277, -inf
    %1316 = vmax.xlane.f32.xlu0 %v1315
    %v1317 = vpop.xlane.xlu0 %1316
    %v1318 = vsel %vm320, %v1282, -inf
    %1319 = vmax.xlane.f32.xlu0 %v1318
    %v1320 = vpop.xlane.xlu0 %1319
    %v1321 = vsel %vm320, %v1287, -inf
    %1322 = vmax.xlane.f32.xlu0 %v1321
    %v1323 = vpop.xlane.xlu0 %1322
    %v1324 = vsel %vm320, %v1292, -inf
    %1325 = vmax.xlane.f32.xlu0 %v1324
    %v1326 = vpop.xlane.xlu0 %1325
    %v1327 = vsel %vm320, %v1297, -inf
    %1328 = vmax.xlane.f32.xlu0 %v1327
    %v1329 = vpop.xlane.xlu0 %1328
    %v1330 = vsel %vm320, %v1302, -inf
    %1331 = vmax.xlane.f32.xlu0 %v1330
    %v1332 = vpop.xlane.xlu0 %1331
    %v1333 = vsel %vm320, %v1307, -inf
    %1334 = vmax.xlane.f32.xlu0 %v1333
    %v1335 = vpop.xlane.xlu0 %1334
    %v1336 = vsel %vm320, %v1312, -inf
    %1337 = vmax.xlane.f32.xlu0 %v1336
    %v1338 = vpop.xlane.xlu0 %1337
    %v1339 = vsub.f32 %v1277, %v1317
    %v1340 = vsub.f32 %v1282, %v1320
    %v1341 = vsub.f32 %v1287, %v1323
    %v1342 = vsub.f32 %v1292, %v1326
    %v1343 = vsub.f32 %v1297, %v1329
    %v1344 = vsub.f32 %v1302, %v1332
    %v1345 = vsub.f32 %v1307, %v1335
    %v1346 = vsub.f32 %v1312, %v1338
    %v1347 = vmul.f32 %v1339, 1.442695
    %v1348 = vpow.pop %v1347
    %v1349 = vmul.f32 %v1340, 1.442695
    %v1350 = vpow.pop %v1349
    %v1351 = vmul.f32 %v1341, 1.442695
    %v1352 = vpow.pop %v1351
    %v1353 = vmul.f32 %v1342, 1.442695
    %v1354 = vpow.pop %v1353
    %v1355 = vmul.f32 %v1343, 1.442695
    %v1356 = vpow.pop %v1355
    %v1357 = vmul.f32 %v1344, 1.442695
    %v1358 = vpow.pop %v1357
    %v1359 = vmul.f32 %v1345, 1.442695
    %v1360 = vpow.pop %v1359
    %v1361 = vmul.f32 %v1346, 1.442695
    %v1362 = vpow.pop %v1361
    %v1363 = vsel %vm320, %v1348, 0.0
    %1364 = vadd.xlane.f32.xlu0 %v1363
    %v1365 = vpop.xlane.xlu0 %1364
    %v1366 = vsel %vm320, %v1350, 0.0
    %1367 = vadd.xlane.f32.xlu0 %v1366
    %v1368 = vpop.xlane.xlu0 %1367
    %v1369 = vsel %vm320, %v1352, 0.0
    %1370 = vadd.xlane.f32.xlu0 %v1369
    %v1371 = vpop.xlane.xlu0 %1370
    %v1372 = vsel %vm320, %v1354, 0.0
    %1373 = vadd.xlane.f32.xlu0 %v1372
    %v1374 = vpop.xlane.xlu0 %1373
    %v1375 = vsel %vm320, %v1356, 0.0
    %1376 = vadd.xlane.f32.xlu0 %v1375
    %v1377 = vpop.xlane.xlu0 %1376
    %v1378 = vsel %vm320, %v1358, 0.0
    %1379 = vadd.xlane.f32.xlu0 %v1378
    %v1380 = vpop.xlane.xlu0 %1379
    %v1381 = vsel %vm320, %v1360, 0.0
    %1382 = vadd.xlane.f32.xlu0 %v1381
    %v1383 = vpop.xlane.xlu0 %1382
    %v1384 = vsel %vm320, %v1362, 0.0
    %1385 = vadd.xlane.f32.xlu0 %v1384
    %v1386 = vpop.xlane.xlu0 %1385
    %v1387 = vrcp.pop %v1365
    %v1388 = vrcp.pop %v1368
    %v1389 = vrcp.pop %v1371
    %v1390 = vrcp.pop %v1374
    %v1391 = vrcp.pop %v1377
    %v1392 = vrcp.pop %v1380
    %v1393 = vrcp.pop %v1383
    %v1394 = vrcp.pop %v1386
    %v1395 = vmul.f32 %v1348, %v1387
    %v1396 = vmul.f32 %v1350, %v1388
    %v1397 = vmul.f32 %v1352, %v1389
    %v1398 = vmul.f32 %v1354, %v1390
    %v1399 = vmul.f32 %v1356, %v1391
    %v1400 = vmul.f32 %v1358, %v1392
    %v1401 = vmul.f32 %v1360, %v1393
    %v1402 = vmul.f32 %v1362, %v1394
    %1403 = vrot.lane.b32.xlu0 %v1110, 96
    %v1404 = vpop.permute.xlu0 %1403
    %1405 = vrot.lane.b32.xlu0 %v1115, 96
    %v1406 = vpop.permute.xlu0 %1405
    %1407 = vrot.lane.b32.xlu0 %v1135, 96
    %v1408 = vpop.permute.xlu0 %1407
    %1409 = vrot.lane.b32.xlu0 %v1137, 96
    %v1410 = vpop.permute.xlu0 %1409
    %1411 = vrot.lane.b32.xlu0 %v1139, 96
    %v1412 = vpop.permute.xlu0 %1411
    %1413 = vrot.lane.b32.xlu0 %v1141, 96
    %v1414 = vpop.permute.xlu0 %1413
    %1415 = vrot.lane.b32.xlu0 %v1143, 96
    %v1416 = vpop.permute.xlu0 %1415
    %1417 = vrot.lane.b32.xlu0 %v1145, 96
    %v1418 = vpop.permute.xlu0 %1417
    %v1428 = vsel %vm320, %v1395, 0
    %v1431 = vsel %vm320, %v1396, 0
    %v1434 = vsel %vm320, %v1397, 0
    %v1437 = vsel %vm320, %v1398, 0
    %v1440 = vsel %vm320, %v1399, 0
    %v1443 = vsel %vm320, %v1400, 0
    %v1446 = vsel %vm320, %v1401, 0
    %v1449 = vsel %vm320, %v1402, 0
    %1451 = vmatprep.subr.mxu0 0.0
    %1452 = vmatpush1.msra.mxu0 0.0
    %1453 = vmatprep.subr.mxu0 0.0
    %1454 = vmatpush1.msra.mxu0 0.0
    %1455 = vmatprep.subr.mxu0 0.0
    %1456 = vmatpush1.msra.mxu0 0.0
    %1457 = vmatprep.subr.mxu0 0.0
    %1458 = vmatpush1.msra.mxu0 0.0
    %1459 = vmatprep.subr.mxu0 0.0
    %1460 = vmatpush1.msra.mxu0 0.0
    %1461 = vmatprep.subr.mxu0 0.0
    %1462 = vmatpush1.msra.mxu0 0.0
    %1463 = vmatprep.subr.mxu0 0.0
    %1464 = vmatpush1.msra.mxu0 0.0
    %1465 = vmatprep.subr.mxu0 0.0
    %1466 = vmatpush1.msra.mxu0 0.0
    %1467 = vmatprep.subr.mxu0 0.0
    %1468 = vmatpush1.msra.mxu0 %v1418
    %1469 = vmatprep.subr.mxu0 0.0
    %1470 = vmatpush1.msra.mxu0 %v1416
    %1471 = vmatprep.subr.mxu0 0.0
    %1472 = vmatpush1.msra.mxu0 %v1414
    %1473 = vmatprep.subr.mxu0 0.0
    %1474 = vmatpush1.msra.mxu0 %v1412
    %1475 = vmatprep.subr.mxu0 0.0
    %1476 = vmatpush1.msra.mxu0 %v1410
    %1477 = vmatprep.subr.mxu0 0.0
    %1478 = vmatpush1.msra.mxu0 %v1408
    %1479 = vmatprep.subr.mxu0 0.0
    %1480 = vmatpush1.msra.mxu0 %v1406
    %1481 = vmatprep.subr.mxu0 0.0
    %1482 = vmatpush1.msra.mxu0 %v1404
    %1483 = vmatprep.subr.mxu0 0.0
    %1484 = vmatpush2.msra.mxu0 0.0
    %1485 = vmatprep.subr.mxu0 0.0
    %1486 = vmatpush2.msra.mxu0 0.0
    %1487 = vmatprep.subr.mxu0 0.0
    %1488 = vmatpush2.msra.mxu0 0.0
    %1489 = vmatprep.subr.mxu0 0.0
    %1490 = vmatpush2.msra.mxu0 0.0
    %1491 = vmatprep.subr.mxu0 0.0
    %1492 = vmatpush2.msra.mxu0 0.0
    %1493 = vmatprep.subr.mxu0 0.0
    %1494 = vmatpush2.msra.mxu0 0.0
    %1495 = vmatprep.subr.mxu0 0.0
    %1496 = vmatpush2.msra.mxu0 0.0
    %1497 = vmatprep.subr.mxu0 0.0
    %1498 = vmatpush2.msra.mxu0 0.0
    %1499 = vmatprep.subr.mxu0 0.0
    %1500 = vmatpush2.msra.mxu0 0.0
    %1501 = vmatprep.subr.mxu0 0.0
    %1502 = vmatpush2.msra.mxu0 0.0
    %1503 = vmatprep.subr.mxu0 0.0
    %1504 = vmatpush2.msra.mxu0 0.0
    %1505 = vmatprep.subr.mxu0 0.0
    %1506 = vmatpush2.msra.mxu0 0.0
    %1507 = vmatprep.subr.mxu0 0.0
    %1508 = vmatpush2.msra.mxu0 0.0
    %1509 = vmatprep.subr.mxu0 0.0
    %1510 = vmatpush2.msra.mxu0 0.0
    %1511 = vmatprep.subr.mxu0 0.0
    %1512 = vmatpush2.msra.mxu0 0.0
    %1513 = vmatprep.subr.mxu0 0.0
    %1514 = vmatpush2.msra.mxu0 0.0
    %1515 = vmatprep.mubr.f32.mxu0 0.0
    %1516 = vmatmul.mubr.f32.gmra.mxu0 %v1428
    %v1517 = vpop.f32.mrf.mxu0
    %v1518 = vadd.f32 0.0, %v1517
    %v1519 = vpop.f32.mrf.mxu0
    %1520 = vmatprep.mubr.f32.mxu0 0.0
    %1521 = vmatmul.mubr.f32.gmra.mxu0 %v1431
    %v1522 = vpop.f32.mrf.mxu0
    %v1523 = vadd.f32 0.0, %v1522
    %v1524 = vpop.f32.mrf.mxu0
    %1525 = vmatprep.mubr.f32.mxu0 0.0
    %1526 = vmatmul.mubr.f32.gmra.mxu0 %v1434
    %v1527 = vpop.f32.mrf.mxu0
    %v1528 = vadd.f32 0.0, %v1527
    %v1529 = vpop.f32.mrf.mxu0
    %1530 = vmatprep.mubr.f32.mxu0 0.0
    %1531 = vmatmul.mubr.f32.gmra.mxu0 %v1437
    %v1532 = vpop.f32.mrf.mxu0
    %v1533 = vadd.f32 0.0, %v1532
    %v1534 = vpop.f32.mrf.mxu0
    %1535 = vmatprep.mubr.f32.mxu0 0.0
    %1536 = vmatmul.mubr.f32.gmra.mxu0 %v1440
    %v1537 = vpop.f32.mrf.mxu0
    %v1538 = vadd.f32 0.0, %v1537
    %v1539 = vpop.f32.mrf.mxu0
    %1540 = vmatprep.mubr.f32.mxu0 0.0
    %1541 = vmatmul.mubr.f32.gmra.mxu0 %v1443
    %v1542 = vpop.f32.mrf.mxu0
    %v1543 = vadd.f32 0.0, %v1542
    %v1544 = vpop.f32.mrf.mxu0
    %1545 = vmatprep.mubr.f32.mxu0 0.0
    %1546 = vmatmul.mubr.f32.gmra.mxu0 %v1446
    %v1547 = vpop.f32.mrf.mxu0
    %v1548 = vadd.f32 0.0, %v1547
    %v1549 = vpop.f32.mrf.mxu0
    %1550 = vmatprep.mubr.f32.mxu0 0.0
    %1551 = vmatmul.mubr.f32.gmra.mxu0 %v1449
    %v1552 = vpop.f32.mrf.mxu0
    %v1553 = vadd.f32 0.0, %v1552
    %v1554 = vpop.f32.mrf.mxu0
    %1555 = vdwg.mxu0
    %v1556 = vld [vmem:[%s4 + $0x20] sm:$0xff]
    %v1557 = vld [vmem:[%s4 + $0x28] sm:$0xff]
    %v1559 = vsel %vm182, %v1528, 0
    %v1562 = vsel %vm182, %v1533, 0
    %1564 = vmatprep.subr.mxu0 0.0
    %1565 = vmatpush1.msra.mxu0 0.0
    %1566 = vmatprep.subr.mxu0 0.0
    %1567 = vmatpush1.msra.mxu0 0.0
    %1568 = vmatprep.subr.mxu0 0.0
    %1569 = vmatpush1.msra.mxu0 0.0
    %1570 = vmatprep.subr.mxu0 0.0
    %1571 = vmatpush1.msra.mxu0 0.0
    %1572 = vmatprep.subr.mxu0 0.0
    %1573 = vmatpush1.msra.mxu0 0.0
    %1574 = vmatprep.subr.mxu0 0.0
    %1575 = vmatpush1.msra.mxu0 0.0
    %1576 = vmatprep.subr.mxu0 0.0
    %1577 = vmatpush1.msra.mxu0 0.0
    %1578 = vmatprep.subr.mxu0 0.0
    %1579 = vmatpush1.msra.mxu0 0.0
    %1580 = vmatprep.subr.mxu0 0.0
    %1581 = vmatpush1.msra.mxu0 0.0
    %1582 = vmatprep.subr.mxu0 0.0
    %1583 = vmatpush1.msra.mxu0 0.0
    %1584 = vmatprep.subr.mxu0 0.0
    %1585 = vmatpush1.msra.mxu0 0.0
    %1586 = vmatprep.subr.mxu0 0.0
    %1587 = vmatpush1.msra.mxu0 0.0
    %1588 = vmatprep.subr.mxu0 0.0
    %1589 = vmatpush1.msra.mxu0 0.0
    %1590 = vmatprep.subr.mxu0 0.0
    %1591 = vmatpush1.msra.mxu0 0.0
    %1592 = vmatprep.subr.mxu0 0.0
    %1593 = vmatpush1.msra.mxu0 0.0
    %1594 = vmatprep.subr.mxu0 0.0
    %1595 = vmatpush1.msra.mxu0 %v1557
    %1596 = vmatprep.subr.mxu0 0.0
    %1597 = vmatpush2.msra.mxu0 0.0
    %1598 = vmatprep.subr.mxu0 0.0
    %1599 = vmatpush2.msra.mxu0 0.0
    %1600 = vmatprep.subr.mxu0 0.0
    %1601 = vmatpush2.msra.mxu0 0.0
    %1602 = vmatprep.subr.mxu0 0.0
    %1603 = vmatpush2.msra.mxu0 0.0
    %1604 = vmatprep.subr.mxu0 0.0
    %1605 = vmatpush2.msra.mxu0 0.0
    %1606 = vmatprep.subr.mxu0 0.0
    %1607 = vmatpush2.msra.mxu0 0.0
    %1608 = vmatprep.subr.mxu0 0.0
    %1609 = vmatpush2.msra.mxu0 0.0
    %1610 = vmatprep.subr.mxu0 0.0
    %1611 = vmatpush2.msra.mxu0 0.0
    %1612 = vmatprep.subr.mxu0 0.0
    %1613 = vmatpush2.msra.mxu0 0.0
    %1614 = vmatprep.subr.mxu0 0.0
    %1615 = vmatpush2.msra.mxu0 0.0
    %1616 = vmatprep.subr.mxu0 0.0
    %1617 = vmatpush2.msra.mxu0 0.0
    %1618 = vmatprep.subr.mxu0 0.0
    %1619 = vmatpush2.msra.mxu0 0.0
    %1620 = vmatprep.subr.mxu0 0.0
    %1621 = vmatpush2.msra.mxu0 0.0
    %1622 = vmatprep.subr.mxu0 0.0
    %1623 = vmatpush2.msra.mxu0 0.0
    %1624 = vmatprep.subr.mxu0 0.0
    %1625 = vmatpush2.msra.mxu0 0.0
    %1626 = vmatprep.subr.mxu0 0.0
    %1627 = vmatpush2.msra.mxu0 0.0
    %1628 = vmatprep.mubr.f32.mxu0 0.0
    %1629 = vmatmul.mubr.f32.gmra.mxu0 %v1559
    %v1630 = vpop.f32.mrf.mxu0
    %v1631 = vadd.f32 0.0, %v1630
    %v1632 = vpop.f32.mrf.mxu0
    %1633 = vmatprep.mubr.f32.mxu0 0.0
    %1634 = vmatmul.mubr.f32.gmra.mxu0 %v1562
    %v1635 = vpop.f32.mrf.mxu0
    %v1636 = vadd.f32 0.0, %v1635
    %v1637 = vpop.f32.mrf.mxu0
    %1638 = vdwg.mxu0
    %v1640 = vsel %vm182, %v1518, 0
    %v1643 = vsel %vm182, %v1523, 0
    %1645 = vmatprep.subr.mxu0 0.0
    %1646 = vmatpush1.msra.mxu0 0.0
    %1647 = vmatprep.subr.mxu0 0.0
    %1648 = vmatpush1.msra.mxu0 0.0
    %1649 = vmatprep.subr.mxu0 0.0
    %1650 = vmatpush1.msra.mxu0 0.0
    %1651 = vmatprep.subr.mxu0 0.0
    %1652 = vmatpush1.msra.mxu0 0.0
    %1653 = vmatprep.subr.mxu0 0.0
    %1654 = vmatpush1.msra.mxu0 0.0
    %1655 = vmatprep.subr.mxu0 0.0
    %1656 = vmatpush1.msra.mxu0 0.0
    %1657 = vmatprep.subr.mxu0 0.0
    %1658 = vmatpush1.msra.mxu0 0.0
    %1659 = vmatprep.subr.mxu0 0.0
    %1660 = vmatpush1.msra.mxu0 0.0
    %1661 = vmatprep.subr.mxu0 0.0
    %1662 = vmatpush1.msra.mxu0 0.0
    %1663 = vmatprep.subr.mxu0 0.0
    %1664 = vmatpush1.msra.mxu0 0.0
    %1665 = vmatprep.subr.mxu0 0.0
    %1666 = vmatpush1.msra.mxu0 0.0
    %1667 = vmatprep.subr.mxu0 0.0
    %1668 = vmatpush1.msra.mxu0 0.0
    %1669 = vmatprep.subr.mxu0 0.0
    %1670 = vmatpush1.msra.mxu0 0.0
    %1671 = vmatprep.subr.mxu0 0.0
    %1672 = vmatpush1.msra.mxu0 0.0
    %1673 = vmatprep.subr.mxu0 0.0
    %1674 = vmatpush1.msra.mxu0 0.0
    %1675 = vmatprep.subr.mxu0 0.0
    %1676 = vmatpush1.msra.mxu0 %v1556
    %1677 = vmatprep.subr.mxu0 0.0
    %1678 = vmatpush2.msra.mxu0 0.0
    %1679 = vmatprep.subr.mxu0 0.0
    %1680 = vmatpush2.msra.mxu0 0.0
    %1681 = vmatprep.subr.mxu0 0.0
    %1682 = vmatpush2.msra.mxu0 0.0
    %1683 = vmatprep.subr.mxu0 0.0
    %1684 = vmatpush2.msra.mxu0 0.0
    %1685 = vmatprep.subr.mxu0 0.0
    %1686 = vmatpush2.msra.mxu0 0.0
    %1687 = vmatprep.subr.mxu0 0.0
    %1688 = vmatpush2.msra.mxu0 0.0
    %1689 = vmatprep.subr.mxu0 0.0
    %1690 = vmatpush2.msra.mxu0 0.0
    %1691 = vmatprep.subr.mxu0 0.0
    %1692 = vmatpush2.msra.mxu0 0.0
    %1693 = vmatprep.subr.mxu0 0.0
    %1694 = vmatpush2.msra.mxu0 0.0
    %1695 = vmatprep.subr.mxu0 0.0
    %1696 = vmatpush2.msra.mxu0 0.0
    %1697 = vmatprep.subr.mxu0 0.0
    %1698 = vmatpush2.msra.mxu0 0.0
    %1699 = vmatprep.subr.mxu0 0.0
    %1700 = vmatpush2.msra.mxu0 0.0
    %1701 = vmatprep.subr.mxu0 0.0
    %1702 = vmatpush2.msra.mxu0 0.0
    %1703 = vmatprep.subr.mxu0 0.0
    %1704 = vmatpush2.msra.mxu0 0.0
    %1705 = vmatprep.subr.mxu0 0.0
    %1706 = vmatpush2.msra.mxu0 0.0
    %1707 = vmatprep.subr.mxu0 0.0
    %1708 = vmatpush2.msra.mxu0 0.0
    %1709 = vmatprep.mubr.f32.mxu0 0.0
    %1710 = vmatmul.mubr.f32.gmra.mxu0 %v1640
    %v1711 = vpop.f32.mrf.mxu0
    %v1712 = vadd.f32 %v1631, %v1711
    %v1713 = vpop.f32.mrf.mxu0
    %1714 = vmatprep.mubr.f32.mxu0 0.0
    %1715 = vmatmul.mubr.f32.gmra.mxu0 %v1643
    %v1716 = vpop.f32.mrf.mxu0
    %v1717 = vadd.f32 %v1636, %v1716
    %v1718 = vpop.f32.mrf.mxu0
    %1719 = vdwg.mxu0
    %v1720 = vld [vmem:[%s4 + $0x30] sm:$0xff]
    %v1722 = vsel %vm182, %v1538, 0
    %v1725 = vsel %vm182, %v1543, 0
    %1727 = vmatprep.subr.mxu0 0.0
    %1728 = vmatpush1.msra.mxu0 0.0
    %1729 = vmatprep.subr.mxu0 0.0
    %1730 = vmatpush1.msra.mxu0 0.0
    %1731 = vmatprep.subr.mxu0 0.0
    %1732 = vmatpush1.msra.mxu0 0.0
    %1733 = vmatprep.subr.mxu0 0.0
    %1734 = vmatpush1.msra.mxu0 0.0
    %1735 = vmatprep.subr.mxu0 0.0
    %1736 = vmatpush1.msra.mxu0 0.0
    %1737 = vmatprep.subr.mxu0 0.0
    %1738 = vmatpush1.msra.mxu0 0.0
    %1739 = vmatprep.subr.mxu0 0.0
    %1740 = vmatpush1.msra.mxu0 0.0
    %1741 = vmatprep.subr.mxu0 0.0
    %1742 = vmatpush1.msra.mxu0 0.0
    %1743 = vmatprep.subr.mxu0 0.0
    %1744 = vmatpush1.msra.mxu0 0.0
    %1745 = vmatprep.subr.mxu0 0.0
    %1746 = vmatpush1.msra.mxu0 0.0
    %1747 = vmatprep.subr.mxu0 0.0
    %1748 = vmatpush1.msra.mxu0 0.0
    %1749 = vmatprep.subr.mxu0 0.0
    %1750 = vmatpush1.msra.mxu0 0.0
    %1751 = vmatprep.subr.mxu0 0.0
    %1752 = vmatpush1.msra.mxu0 0.0
    %1753 = vmatprep.subr.mxu0 0.0
    %1754 = vmatpush1.msra.mxu0 0.0
    %1755 = vmatprep.subr.mxu0 0.0
    %1756 = vmatpush1.msra.mxu0 0.0
    %1757 = vmatprep.subr.mxu0 0.0
    %1758 = vmatpush1.msra.mxu0 %v1720
    %1759 = vmatprep.subr.mxu0 0.0
    %1760 = vmatpush2.msra.mxu0 0.0
    %1761 = vmatprep.subr.mxu0 0.0
    %1762 = vmatpush2.msra.mxu0 0.0
    %1763 = vmatprep.subr.mxu0 0.0
    %1764 = vmatpush2.msra.mxu0 0.0
    %1765 = vmatprep.subr.mxu0 0.0
    %1766 = vmatpush2.msra.mxu0 0.0
    %1767 = vmatprep.subr.mxu0 0.0
    %1768 = vmatpush2.msra.mxu0 0.0
    %1769 = vmatprep.subr.mxu0 0.0
    %1770 = vmatpush2.msra.mxu0 0.0
    %1771 = vmatprep.subr.mxu0 0.0
    %1772 = vmatpush2.msra.mxu0 0.0
    %1773 = vmatprep.subr.mxu0 0.0
    %1774 = vmatpush2.msra.mxu0 0.0
    %1775 = vmatprep.subr.mxu0 0.0
    %1776 = vmatpush2.msra.mxu0 0.0
    %1777 = vmatprep.subr.mxu0 0.0
    %1778 = vmatpush2.msra.mxu0 0.0
    %1779 = vmatprep.subr.mxu0 0.0
    %1780 = vmatpush2.msra.mxu0 0.0
    %1781 = vmatprep.subr.mxu0 0.0
    %1782 = vmatpush2.msra.mxu0 0.0
    %1783 = vmatprep.subr.mxu0 0.0
    %1784 = vmatpush2.msra.mxu0 0.0
    %1785 = vmatprep.subr.mxu0 0.0
    %1786 = vmatpush2.msra.mxu0 0.0
    %1787 = vmatprep.subr.mxu0 0.0
    %1788 = vmatpush2.msra.mxu0 0.0
    %1789 = vmatprep.subr.mxu0 0.0
    %1790 = vmatpush2.msra.mxu0 0.0
    %1791 = vmatprep.mubr.f32.mxu0 0.0
    %1792 = vmatmul.mubr.f32.gmra.mxu0 %v1722
    %v1793 = vpop.f32.mrf.mxu0
    %v1794 = vadd.f32 0.0, %v1793
    %v1795 = vpop.f32.mrf.mxu0
    %1796 = vmatprep.mubr.f32.mxu0 0.0
    %1797 = vmatmul.mubr.f32.gmra.mxu0 %v1725
    %v1798 = vpop.f32.mrf.mxu0
    %v1799 = vadd.f32 0.0, %v1798
    %v1800 = vpop.f32.mrf.mxu0
    %1801 = vdwg.mxu0
    %v1802 = vadd.f32 %v1712, %v1794
    %v1803 = vadd.f32 %v1717, %v1799
    %v1804 = vld [vmem:[%s4 + $0x38] sm:$0xff]
    %v1806 = vsel %vm182, %v1548, 0
    %v1809 = vsel %vm182, %v1553, 0
    %1811 = vmatprep.subr.mxu0 0.0
    %1812 = vmatpush1.msra.mxu0 0.0
    %1813 = vmatprep.subr.mxu0 0.0
    %1814 = vmatpush1.msra.mxu0 0.0
    %1815 = vmatprep.subr.mxu0 0.0
    %1816 = vmatpush1.msra.mxu0 0.0
    %1817 = vmatprep.subr.mxu0 0.0
    %1818 = vmatpush1.msra.mxu0 0.0
    %1819 = vmatprep.subr.mxu0 0.0
    %1820 = vmatpush1.msra.mxu0 0.0
    %1821 = vmatprep.subr.mxu0 0.0
    %1822 = vmatpush1.msra.mxu0 0.0
    %1823 = vmatprep.subr.mxu0 0.0
    %1824 = vmatpush1.msra.mxu0 0.0
    %1825 = vmatprep.subr.mxu0 0.0
    %1826 = vmatpush1.msra.mxu0 0.0
    %1827 = vmatprep.subr.mxu0 0.0
    %1828 = vmatpush1.msra.mxu0 0.0
    %1829 = vmatprep.subr.mxu0 0.0
    %1830 = vmatpush1.msra.mxu0 0.0
    %1831 = vmatprep.subr.mxu0 0.0
    %1832 = vmatpush1.msra.mxu0 0.0
    %1833 = vmatprep.subr.mxu0 0.0
    %1834 = vmatpush1.msra.mxu0 0.0
    %1835 = vmatprep.subr.mxu0 0.0
    %1836 = vmatpush1.msra.mxu0 0.0
    %1837 = vmatprep.subr.mxu0 0.0
    %1838 = vmatpush1.msra.mxu0 0.0
    %1839 = vmatprep.subr.mxu0 0.0
    %1840 = vmatpush1.msra.mxu0 0.0
    %1841 = vmatprep.subr.mxu0 0.0
    %1842 = vmatpush1.msra.mxu0 %v1804
    %1843 = vmatprep.subr.mxu0 0.0
    %1844 = vmatpush2.msra.mxu0 0.0
    %1845 = vmatprep.subr.mxu0 0.0
    %1846 = vmatpush2.msra.mxu0 0.0
    %1847 = vmatprep.subr.mxu0 0.0
    %1848 = vmatpush2.msra.mxu0 0.0
    %1849 = vmatprep.subr.mxu0 0.0
    %1850 = vmatpush2.msra.mxu0 0.0
    %1851 = vmatprep.subr.mxu0 0.0
    %1852 = vmatpush2.msra.mxu0 0.0
    %1853 = vmatprep.subr.mxu0 0.0
    %1854 = vmatpush2.msra.mxu0 0.0
    %1855 = vmatprep.subr.mxu0 0.0
    %1856 = vmatpush2.msra.mxu0 0.0
    %1857 = vmatprep.subr.mxu0 0.0
    %1858 = vmatpush2.msra.mxu0 0.0
    %1859 = vmatprep.subr.mxu0 0.0
    %1860 = vmatpush2.msra.mxu0 0.0
    %1861 = vmatprep.subr.mxu0 0.0
    %1862 = vmatpush2.msra.mxu0 0.0
    %1863 = vmatprep.subr.mxu0 0.0
    %1864 = vmatpush2.msra.mxu0 0.0
    %1865 = vmatprep.subr.mxu0 0.0
    %1866 = vmatpush2.msra.mxu0 0.0
    %1867 = vmatprep.subr.mxu0 0.0
    %1868 = vmatpush2.msra.mxu0 0.0
    %1869 = vmatprep.subr.mxu0 0.0
    %1870 = vmatpush2.msra.mxu0 0.0
    %1871 = vmatprep.subr.mxu0 0.0
    %1872 = vmatpush2.msra.mxu0 0.0
    %1873 = vmatprep.subr.mxu0 0.0
    %1874 = vmatpush2.msra.mxu0 0.0
    %1875 = vmatprep.mubr.f32.mxu0 0.0
    %1876 = vmatmul.mubr.f32.gmra.mxu0 %v1806
    %v1877 = vpop.f32.mrf.mxu0
    %v1878 = vadd.f32 0.0, %v1877
    %v1879 = vpop.f32.mrf.mxu0
    %1880 = vmatprep.mubr.f32.mxu0 0.0
    %1881 = vmatmul.mubr.f32.gmra.mxu0 %v1809
    %v1882 = vpop.f32.mrf.mxu0
    %v1883 = vadd.f32 0.0, %v1882
    %v1884 = vpop.f32.mrf.mxu0
    %1885 = vdwg.mxu0
    %v1886 = vadd.f32 %v1802, %v1878
    %v1887 = vadd.f32 %v1803, %v1883
    %1889 = vrot.lane.b32.xlu0 %v151, 96
    %v1890 = vpop.permute.xlu0 %1889
    %v1892 = vadd.f32 %v1886, %v1890
    %v1893 = vadd.f32 %v1887, %v1890
    %v1894 = vadd.f32 %v929, %v1892
    %v1895 = vadd.f32 %v930, %v1893
    %v1896 = vld [vmem:[%s5 + $0x3] ss:$0 sm:$0xff]
    %v1897 = vld [vmem:[%s5 + $0x4] ss:$0 sm:$0xff]
    %v1898 = vsel %vm69, %v1894, 0.0
    %1899 = vadd.xlane.f32.xlu0 %v1898
    %v1900 = vpop.xlane.xlu0 %1899
    %v1901 = vsel %vm69, %v1895, 0.0
    %1902 = vadd.xlane.f32.xlu0 %v1901
    %v1903 = vpop.xlane.xlu0 %1902
    %v1904 = vmul.f32 %v1900, %v906
    %v1905 = vmul.f32 %v1903, %v906
    %v1906 = vsub.f32 %v1894, %v1904
    %v1907 = vsub.f32 %v1895, %v1905
    %v1908 = vmul.f32 %v1906, %v1906
    %v1909 = vmul.f32 %v1907, %v1907
    %v1910 = vsel %vm69, %v1908, 0.0
    %1911 = vadd.xlane.f32.xlu0 %v1910
    %v1912 = vpop.xlane.xlu0 %1911
    %v1913 = vsel %vm69, %v1909, 0.0
    %1914 = vadd.xlane.f32.xlu0 %v1913
    %v1915 = vpop.xlane.xlu0 %1914
    %v1916 = vmul.f32 %v1912, %v906
    %v1917 = vmul.f32 %v1915, %v906
    %v1918 = vadd.f32 %v1916, 1e-05
    %v1919 = vadd.f32 %v1917, 1e-05
    %v1920 = vrsqrt.pop %v1918
    %v1921 = vrsqrt.pop %v1919
    %v1922 = vmul.f32 %v1906, %v1920
    %v1923 = vmul.f32 %v1907, %v1921
    %v1924 = vmul.f32 %v1922, %v1896
    %v1925 = vmul.f32 %v1923, %v1896
    %v1926 = vadd.f32 %v1924, %v1897
    %v1927 = vadd.f32 %v1925, %v1897
    %1932 = vrot.lane.b32.xlu0 %v1032, 64
    %v1933 = vpop.permute.xlu0 %1932
    %1934 = vrot.lane.b32.xlu0 %v1033, 64
    %v1935 = vpop.permute.xlu0 %1934
    %1936 = vrot.lane.b32.xlu0 %v1034, 64
    %v1937 = vpop.permute.xlu0 %1936
    %1938 = vrot.lane.b32.xlu0 %v1035, 64
    %v1939 = vpop.permute.xlu0 %1938
    %1945 = vrot.lane.b32.xlu0 %v1036, 64
    %v1946 = vpop.permute.xlu0 %1945
    %v1949 = vsel %vm69, %v1926, 0
    %v1952 = vsel %vm69, %v1927, 0
    %1954 = vmatprep.subr.mxu0 0.0
    %1955 = vmatpush1.msra.mxu0 0.0
    %1956 = vmatprep.subr.mxu0 0.0
    %1957 = vmatpush1.msra.mxu0 0.0
    %1958 = vmatprep.subr.mxu0 0.0
    %1959 = vmatpush1.msra.mxu0 0.0
    %1960 = vmatprep.subr.mxu0 0.0
    %1961 = vmatpush1.msra.mxu0 0.0
    %1962 = vmatprep.subr.mxu0 0.0
    %1963 = vmatpush1.msra.mxu0 0.0
    %1964 = vmatprep.subr.mxu0 0.0
    %1965 = vmatpush1.msra.mxu0 0.0
    %1966 = vmatprep.subr.mxu0 0.0
    %1967 = vmatpush1.msra.mxu0 0.0
    %1968 = vmatprep.subr.mxu0 0.0
    %1969 = vmatpush1.msra.mxu0 0.0
    %1970 = vmatprep.subr.mxu0 0.0
    %1971 = vmatpush1.msra.mxu0 0.0
    %1972 = vmatprep.subr.mxu0 0.0
    %1973 = vmatpush1.msra.mxu0 0.0
    %1974 = vmatprep.subr.mxu0 0.0
    %1975 = vmatpush1.msra.mxu0 0.0
    %1976 = vmatprep.subr.mxu0 0.0
    %1977 = vmatpush1.msra.mxu0 0.0
    %1978 = vmatprep.subr.mxu0 0.0
    %1979 = vmatpush1.msra.mxu0 %v1939
    %1980 = vmatprep.subr.mxu0 0.0
    %1981 = vmatpush1.msra.mxu0 %v1937
    %1982 = vmatprep.subr.mxu0 0.0
    %1983 = vmatpush1.msra.mxu0 %v1935
    %1984 = vmatprep.subr.mxu0 0.0
    %1985 = vmatpush1.msra.mxu0 %v1933
    %1986 = vmatprep.subr.mxu0 0.0
    %1987 = vmatpush2.msra.mxu0 0.0
    %1988 = vmatprep.subr.mxu0 0.0
    %1989 = vmatpush2.msra.mxu0 0.0
    %1990 = vmatprep.subr.mxu0 0.0
    %1991 = vmatpush2.msra.mxu0 0.0
    %1992 = vmatprep.subr.mxu0 0.0
    %1993 = vmatpush2.msra.mxu0 0.0
    %1994 = vmatprep.subr.mxu0 0.0
    %1995 = vmatpush2.msra.mxu0 0.0
    %1996 = vmatprep.subr.mxu0 0.0
    %1997 = vmatpush2.msra.mxu0 0.0
    %1998 = vmatprep.subr.mxu0 0.0
    %1999 = vmatpush2.msra.mxu0 0.0
    %2000 = vmatprep.subr.mxu0 0.0
    %2001 = vmatpush2.msra.mxu0 0.0
    %2002 = vmatprep.subr.mxu0 0.0
    %2003 = vmatpush2.msra.mxu0 0.0
    %2004 = vmatprep.subr.mxu0 0.0
    %2005 = vmatpush2.msra.mxu0 0.0
    %2006 = vmatprep.subr.mxu0 0.0
    %2007 = vmatpush2.msra.mxu0 0.0
    %2008 = vmatprep.subr.mxu0 0.0
    %2009 = vmatpush2.msra.mxu0 0.0
    %2010 = vmatprep.subr.mxu0 0.0
    %2011 = vmatpush2.msra.mxu0 0.0
    %2012 = vmatprep.subr.mxu0 0.0
    %2013 = vmatpush2.msra.mxu0 0.0
    %2014 = vmatprep.subr.mxu0 0.0
    %2015 = vmatpush2.msra.mxu0 0.0
    %2016 = vmatprep.subr.mxu0 0.0
    %2017 = vmatpush2.msra.mxu0 0.0
    %2018 = vmatprep.mubr.f32.mxu0 0.0
    %2019 = vmatmul.mubr.f32.gmra.mxu0 %v1949
    %v2020 = vpop.f32.mrf.mxu0
    %v2021 = vadd.f32 %v1946, %v2020
    %v2022 = vpop.f32.mrf.mxu0
    %2023 = vmatprep.mubr.f32.mxu0 0.0
    %2024 = vmatmul.mubr.f32.gmra.mxu0 %v1952
    %v2025 = vpop.f32.mrf.mxu0
    %v2026 = vadd.f32 %v1946, %v2025
    %v2027 = vpop.f32.mrf.mxu0
    %2028 = vdwg.mxu0
    %v2029 = vmax.f32 %v2021, 0.0
    %v2030 = vmax.f32 %v2026, 0.0
    %v2031 = vld [vmem:[%s4 + $0x40] sm:$0xff]
    %v2032 = vld [vmem:[%s4 + $0x48] sm:$0xff]
    %v2033 = vld [vmem:[%s4 + $0x50] sm:$0xff]
    %v2034 = vld [vmem:[%s4 + $0x58] sm:$0xff]
    %v2035 = vld [vmem:[%s4 + $0x60] sm:$0xff]
    %v2036 = vld [vmem:[%s4 + $0x68] sm:$0xff]
    %v2037 = vld [vmem:[%s4 + $0x70] sm:$0xff]
    %v2038 = vld [vmem:[%s4 + $0x78] sm:$0xff]
    %2039 = vrot.lane.b32.xlu0 %v151, 64
    %v2040 = vpop.permute.xlu0 %2039
    %v2043 = vsel %vm320, %v2029, 0
    %v2046 = vsel %vm320, %v2030, 0
    %2048 = vmatprep.subr.mxu0 0.0
    %2049 = vmatpush1.msra.mxu0 0.0
    %2050 = vmatprep.subr.mxu0 0.0
    %2051 = vmatpush1.msra.mxu0 0.0
    %2052 = vmatprep.subr.mxu0 0.0
    %2053 = vmatpush1.msra.mxu0 0.0
    %2054 = vmatprep.subr.mxu0 0.0
    %2055 = vmatpush1.msra.mxu0 0.0
    %2056 = vmatprep.subr.mxu0 0.0
    %2057 = vmatpush1.msra.mxu0 0.0
    %2058 = vmatprep.subr.mxu0 0.0
    %2059 = vmatpush1.msra.mxu0 0.0
    %2060 = vmatprep.subr.mxu0 0.0
    %2061 = vmatpush1.msra.mxu0 0.0
    %2062 = vmatprep.subr.mxu0 0.0
    %2063 = vmatpush1.msra.mxu0 0.0
    %2064 = vmatprep.subr.mxu0 0.0
    %2065 = vmatpush1.msra.mxu0 %v2038
    %2066 = vmatprep.subr.mxu0 0.0
    %2067 = vmatpush1.msra.mxu0 %v2037
    %2068 = vmatprep.subr.mxu0 0.0
    %2069 = vmatpush1.msra.mxu0 %v2036
    %2070 = vmatprep.subr.mxu0 0.0
    %2071 = vmatpush1.msra.mxu0 %v2035
    %2072 = vmatprep.subr.mxu0 0.0
    %2073 = vmatpush1.msra.mxu0 %v2034
    %2074 = vmatprep.subr.mxu0 0.0
    %2075 = vmatpush1.msra.mxu0 %v2033
    %2076 = vmatprep.subr.mxu0 0.0
    %2077 = vmatpush1.msra.mxu0 %v2032
    %2078 = vmatprep.subr.mxu0 0.0
    %2079 = vmatpush1.msra.mxu0 %v2031
    %2080 = vmatprep.subr.mxu0 0.0
    %2081 = vmatpush2.msra.mxu0 0.0
    %2082 = vmatprep.subr.mxu0 0.0
    %2083 = vmatpush2.msra.mxu0 0.0
    %2084 = vmatprep.subr.mxu0 0.0
    %2085 = vmatpush2.msra.mxu0 0.0
    %2086 = vmatprep.subr.mxu0 0.0
    %2087 = vmatpush2.msra.mxu0 0.0
    %2088 = vmatprep.subr.mxu0 0.0
    %2089 = vmatpush2.msra.mxu0 0.0
    %2090 = vmatprep.subr.mxu0 0.0
    %2091 = vmatpush2.msra.mxu0 0.0
    %2092 = vmatprep.subr.mxu0 0.0
    %2093 = vmatpush2.msra.mxu0 0.0
    %2094 = vmatprep.subr.mxu0 0.0
    %2095 = vmatpush2.msra.mxu0 0.0
    %2096 = vmatprep.subr.mxu0 0.0
    %2097 = vmatpush2.msra.mxu0 0.0
    %2098 = vmatprep.subr.mxu0 0.0
    %2099 = vmatpush2.msra.mxu0 0.0
    %2100 = vmatprep.subr.mxu0 0.0
    %2101 = vmatpush2.msra.mxu0 0.0
    %2102 = vmatprep.subr.mxu0 0.0
    %2103 = vmatpush2.msra.mxu0 0.0
    %2104 = vmatprep.subr.mxu0 0.0
    %2105 = vmatpush2.msra.mxu0 0.0
    %2106 = vmatprep.subr.mxu0 0.0
    %2107 = vmatpush2.msra.mxu0 0.0
    %2108 = vmatprep.subr.mxu0 0.0
    %2109 = vmatpush2.msra.mxu0 0.0
    %2110 = vmatprep.subr.mxu0 0.0
    %2111 = vmatpush2.msra.mxu0 0.0
    %2112 = vmatprep.mubr.f32.mxu0 0.0
    %2113 = vmatmul.mubr.f32.gmra.mxu0 %v2043
    %v2114 = vpop.f32.mrf.mxu0
    %v2115 = vadd.f32 %v2040, %v2114
    %v2116 = vpop.f32.mrf.mxu0
    %2117 = vmatprep.mubr.f32.mxu0 0.0
    %2118 = vmatmul.mubr.f32.gmra.mxu0 %v2046
    %v2119 = vpop.f32.mrf.mxu0
    %v2120 = vadd.f32 %v2040, %v2119
    %v2121 = vpop.f32.mrf.mxu0
    %2122 = vdwg.mxu0
    %v2123 = vadd.f32 %v1926, %v2115
    %v2124 = vadd.f32 %v1927, %v2120
    %v2125 = vld [vmem:[%s5 + $0x5] ss:$0 sm:$0xff]
    %v2126 = vld [vmem:[%s5 + $0x6] ss:$0 sm:$0xff]
    %v2127 = vsel %vm69, %v2123, 0.0
    %2128 = vadd.xlane.f32.xlu0 %v2127
    %v2129 = vpop.xlane.xlu0 %2128
    %v2130 = vsel %vm69, %v2124, 0.0
    %2131 = vadd.xlane.f32.xlu0 %v2130
    %v2132 = vpop.xlane.xlu0 %2131
    %v2133 = vmul.f32 %v2129, %v906
    %v2134 = vmul.f32 %v2132, %v906
    %v2135 = vsub.f32 %v2123, %v2133
    %v2136 = vsub.f32 %v2124, %v2134
    %v2137 = vmul.f32 %v2135, %v2135
    %v2138 = vmul.f32 %v2136, %v2136
    %v2139 = vsel %vm69, %v2137, 0.0
    %2140 = vadd.xlane.f32.xlu0 %v2139
    %v2141 = vpop.xlane.xlu0 %2140
    %v2142 = vsel %vm69, %v2138, 0.0
    %2143 = vadd.xlane.f32.xlu0 %v2142
    %v2144 = vpop.xlane.xlu0 %2143
    %v2145 = vmul.f32 %v2141, %v906
    %v2146 = vmul.f32 %v2144, %v906
    %v2147 = vadd.f32 %v2145, 1e-05
    %v2148 = vadd.f32 %v2146, 1e-05
    %v2149 = vrsqrt.pop %v2147
    %v2150 = vrsqrt.pop %v2148
    %v2151 = vmul.f32 %v2135, %v2149
    %v2152 = vmul.f32 %v2136, %v2150
    %v2153 = vmul.f32 %v2151, %v2125
    %v2154 = vmul.f32 %v2152, %v2125
    %v2155 = vadd.f32 %v2153, %v2126
    %v2156 = vadd.f32 %v2154, %v2126
    %2157 = vst.msk [vmem:[#allocation7] sm:$0xff] %vm69, %v2155
    %2158 = vst.msk [vmem:[#allocation7 + $0x8] sm:$0xff] %vm69, %v2156
    // Predicated region
    $region34: #{tpu_custom_call.1} parent=1 // pred_check
      _
    $region35: #{tpu_custom_call.1} parent=1 // pred_check_branch
      %2160 = sbr.rel (0) target = $region37
    $region36: #{tpu_custom_call.1} parent=1 // pred_region
      %s2162 = ssub.s32 256, 256
      %2163 = vsyncadd [#allocation4], %s2162
      %s2164 = sshll.u32 [#allocation7], 4
      %s2165 = int_to_ptr.vmem [resolvable:$true] %s2164
      %2170 = dma.vmem_to_hbm [thread:$0]  %s2165, 256, %s6, [#allocation4], 128, 128, 8
    $region37: #{tpu_custom_call.1} parent=1 // pred_fallthru
      _
    // Predicated region
    $region38: #{tpu_custom_call.1} parent=1 // pred_check
      _
    $region39: #{tpu_custom_call.1} parent=1 // pred_check_branch
      %2172 = sbr.rel (0) target = $region41
    $region40: #{tpu_custom_call.1} parent=1 // pred_region
      %2173 = dma.done [#allocation4], 256
    $region41: #{tpu_custom_call.1} parent=1 // pred_fallthru
      _
    %2174 = vsyncpa [#allocation3], 1
    %2175 = vsyncpa [#allocation6], 1
    %2176 = vsyncpa [#allocation4], 1

</llo_original>
